<compile_context>
chip_gen: v7x
topology: tpu7x:2x2x1
jax: 0.10.0
libtpu: 0.0.40
codegen_flags: <defaults>
</compile_context>

<pallas_src>
import jax
import jax.numpy as jnp
from jax.experimental import pallas as pl
from jax.experimental.pallas import tpu as pltpu


def _pflow_rhs_kernel(t_ref, zt_ref, cond_ref, w1t_ref, w1z_ref, w2_ref,
                      b2_ref, out_ref):
    """One RHS evaluation: dzt = W2 @ tanh(W1_z @ zt + cond + t*W1_t) + b2."""
    t = t_ref[pl.program_id(0)]                      # scalar time from SMEM
    zt_bf = zt_ref[...].astype(jnp.bfloat16)         # bf16 MXU input
    h = (jnp.dot(zt_bf, w1z_ref[...], preferred_element_type=jnp.float32)
         + cond_ref[...]                             # y @ W1y + b1 (precomputed)
         + t * w1t_ref[...])                         # ones(B)*t contribution
    h = jnp.tanh(h)                                  # f32 elementwise (v5e-safe)
    out = (jnp.dot(h.astype(jnp.bfloat16), w2_ref[...],
                   preferred_element_type=jnp.float32)
           + b2_ref[...])
    out_ref[...] = out.astype(out_ref.dtype)


def pflow_rhs_batched(t_all, zt_all, y, params):
    """Evaluate the RHS for N (t, zt) pairs in a single pallas_call.

    t_all:  (N,)            scalar times
    zt_all: (N, B, C, H, W) states
    y:      (B, Dy)         conditioning (constant across evaluations)
    returns (N, B, C, H, W) drifts
    """
    N, B, C, H, W = zt_all.shape
    D = C * H * W
    w1z, w1t, w1y, b1, w2, b2 = params
    HID = w1z.shape[1]

    zt_flat = zt_all.reshape(N, B, D).astype(jnp.float32)
    t_all = t_all.astype(jnp.float32)
    # Conditioning bias is constant across RHS calls within a solve: fuse it
    # outside the kernel once.
    cond = (jnp.dot(y.astype(jnp.float32), w1y.astype(jnp.float32),
                    preferred_element_type=jnp.float32) + b1)

    grid_spec = pltpu.PrefetchScalarGridSpec(
        num_scalar_prefetch=1,                       # t_all -> SMEM
        grid=(N,),
        in_specs=[
            # per-evaluation state block (squeezed eval axis)
            pl.BlockSpec((None, B, D), lambda n, t: (n, 0, 0)),
            # constant index maps: these stay VMEM-resident across the grid
            pl.BlockSpec((B, HID),     lambda n, t: (0, 0)),   # cond bias
            pl.BlockSpec((1, HID),     lambda n, t: (0, 0)),   # W1_t
            pl.BlockSpec((D, HID),     lambda n, t: (0, 0)),   # W1_z (bf16)
            pl.BlockSpec((HID, D),     lambda n, t: (0, 0)),   # W2   (bf16)
            pl.BlockSpec((1, D),       lambda n, t: (0, 0)),   # b2
        ],
        out_specs=pl.BlockSpec((None, B, D), lambda n, t: (n, 0, 0)),
    )

    dzt_flat = pl.pallas_call(
        _pflow_rhs_kernel,
        out_shape=jax.ShapeDtypeStruct((N, B, D), jnp.float32),
        grid_spec=grid_spec,
        compiler_params=pltpu.CompilerParams(
            dimension_semantics=("parallel",),       # megacore on v7x
        ),
    )(t_all, zt_flat, cond, w1t, w1z, w2, b2)

    return dzt_flat.reshape(N, B, C, H, W)


def pflow_rhs(t, states, y, params):
    """Mirrors PFlowRHS.forward(t, states) -> (dzt,) for a single evaluation."""
    zt, = states
    t_arr = jnp.full((1,), t, dtype=jnp.float32)
    dzt = pflow_rhs_batched(t_arr, zt[None], y, params)[0]
    return (dzt,)


def _reference_batched(t_all, zt_all, y, params):
    """Pure-JAX reference with the same stored precision (bf16 weights, f32 acc)."""
    w1z, w1t, w1y, b1, w2, b2 = params
    N, B, C, H, W = zt_all.shape
    D = C * H * W
    zt_flat = zt_all.reshape(N, B, D)
    cond = (y.astype(jnp.float32) @ w1y.astype(jnp.float32) + b1)      # (B, HID)
    t_arr = jnp.ones((N, B), jnp.float32) * t_all[:, None]             # ones(B)*t
    h = (jnp.einsum('nbd,dh->nbh', zt_flat.astype(jnp.bfloat16), w1z,
                    preferred_element_type=jnp.float32)
         + cond[None]
         + t_arr[:, :, None] * w1t[None])
    h = jnp.tanh(h)
    out = (jnp.einsum('nbh,hd->nbd', h.astype(jnp.bfloat16), w2,
                      preferred_element_type=jnp.float32)
           + b2[None])
    return out.reshape(N, B, C, H, W)


if __name__ == "__main__":
    # Small shapes consistent with the forward: zt is an NCHW state tensor.
    B, C, H, W = 2, 4, 16, 16
    D = C * H * W          # 1024
    Dy = 8                 # conditioning dim
    HID = 128              # hidden width of synthetic drift MLP (full lane width)
    N_EVALS = 8            # RHS evaluations batched into one pallas_call

    key = jax.random.PRNGKey(0)
    ks = jax.random.split(key, 8)

    zt_all = jax.random.normal(ks[0], (N_EVALS, B, C, H, W), jnp.float32)
    y = jax.random.normal(ks[1], (B, Dy), jnp.float32)
    t_all = jnp.linspace(0.0, 1.0, N_EVALS, dtype=jnp.float32)

    params = (
        (jax.random.normal(ks[2], (D, HID), jnp.float32) * 0.02
         ).astype(jnp.bfloat16),                                   # W1_z (bf16)
        jax.random.normal(ks[3], (1, HID), jnp.float32) * 0.02,    # W1_t (time)
        jax.random.normal(ks[4], (Dy, HID), jnp.float32) * 0.02,   # W1_y (cond)
        jax.random.normal(ks[5], (1, HID), jnp.float32) * 0.02,    # b1
        (jax.random.normal(ks[6], (HID, D), jnp.float32) * 0.02
         ).astype(jnp.bfloat16),                                   # W2   (bf16)
        jax.random.normal(ks[7], (1, D), jnp.float32) * 0.02,      # b2
    )

    # Batched path: amortizes launch overhead + weight DMA across evaluations.
    dzt_all = jax.block_until_ready(pflow_rhs_batched(t_all, zt_all, y, params))
    dzt_ref = _reference_batched(t_all, zt_all, y, params)
    assert dzt_all.shape == (N_EVALS, B, C, H, W)
    assert jnp.allclose(dzt_all, dzt_ref, atol=1e-2, rtol=1e-2)

    # Single-call path matching PFlowRHS.forward(t, states) -> (dzt,).
    (dzt_single,) = pflow_rhs(0.37, (zt_all[0],), y, params)
    dzt_single = jax.block_until_ready(dzt_single)
    dzt_single_ref = _reference_batched(
        jnp.array([0.37], jnp.float32), zt_all[:1], y, params)[0]
    assert dzt_single.shape == (B, C, H, W)
    assert jnp.allclose(dzt_single, dzt_single_ref, atol=1e-2, rtol=1e-2)

    print("KERNEL_OK")
</pallas_src>

<mosaic_0001>
module attributes {stable_mosaic.version = 11 : i64} {
  func.func @_pflow_rhs_kernel(%arg0: i32, %arg1: memref<8xf32, #tpu.memory_space<smem>>, %arg2: memref<1x2x1024xf32, #tpu.memory_space<vmem>>, %arg3: memref<2x128xf32, #tpu.memory_space<vmem>>, %arg4: memref<1x128xf32, #tpu.memory_space<vmem>>, %arg5: memref<1024x128xbf16, #tpu.memory_space<vmem>>, %arg6: memref<128x1024xbf16, #tpu.memory_space<vmem>>, %arg7: memref<1x1024xf32, #tpu.memory_space<vmem>>, %arg8: memref<1x2x1024xf32, #tpu.memory_space<vmem>>) attributes {dimension_semantics = [#tpu.dimension_semantics<parallel>], iteration_bounds = array<i64: 8>, scalar_prefetch = 1 : i64, scratch_operands = 0 : i64, tpu.core_type = #tpu.core_type<tc>, window_params = [{transform_indices = @transform_0, window_bounds = array<i64: 1, 2, 1024>}, {pipeline_mode = #tpu.pipeline_mode<synchronous>, transform_indices = @transform_1, window_bounds = array<i64: 2, 128>}, {pipeline_mode = #tpu.pipeline_mode<synchronous>, transform_indices = @transform_2, window_bounds = array<i64: 1, 128>}, {pipeline_mode = #tpu.pipeline_mode<synchronous>, transform_indices = @transform_3, window_bounds = array<i64: 1024, 128>}, {pipeline_mode = #tpu.pipeline_mode<synchronous>, transform_indices = @transform_4, window_bounds = array<i64: 128, 1024>}, {pipeline_mode = #tpu.pipeline_mode<synchronous>, transform_indices = @transform_5, window_bounds = array<i64: 1, 1024>}, {transform_indices = @transform_6, window_bounds = array<i64: 1, 2, 1024>}]} {
    %0 = arith.index_cast %arg0 : i32 to index
    %1 = memref.load %arg1[%0] : memref<8xf32, #tpu.memory_space<smem>>
    %c0 = arith.constant 0 : index
    %c0_0 = arith.constant 0 : index
    %c0_1 = arith.constant 0 : index
    %2 = vector.load %arg2[%c0, %c0_0, %c0_1] : memref<1x2x1024xf32, #tpu.memory_space<vmem>>, vector<1x2x1024xf32>
    %3 = vector.shape_cast %2 : vector<1x2x1024xf32> to vector<2x1024xf32>
    %4 = arith.truncf %3 : vector<2x1024xf32> to vector<2x1024xbf16>
    %c0_2 = arith.constant 0 : index
    %c0_3 = arith.constant 0 : index
    %5 = vector.load %arg5[%c0_2, %c0_3] : memref<1024x128xbf16, #tpu.memory_space<vmem>>, vector<1024x128xbf16>
    %cst = arith.constant dense<0.000000e+00> : vector<2x128xf32>
    %6 = tpu.matmul %4, %5, %cst {dimension_numbers = #tpu.dot_dimension_numbers<[1], [0], [0], [1], [0, 0, 1, 1], [], []>} : vector<2x1024xbf16>, vector<1024x128xbf16>, vector<2x128xf32> -> vector<2x128xf32>
    %c0_4 = arith.constant 0 : index
    %c0_5 = arith.constant 0 : index
    %7 = vector.load %arg3[%c0_4, %c0_5] : memref<2x128xf32, #tpu.memory_space<vmem>>, vector<2x128xf32>
    %8 = arith.addf %6, %7 : vector<2x128xf32>
    %c0_6 = arith.constant 0 : index
    %c0_7 = arith.constant 0 : index
    %9 = vector.load %arg4[%c0_6, %c0_7] : memref<1x128xf32, #tpu.memory_space<vmem>>, vector<1x128xf32>
    %10 = vector.broadcast %1 : f32 to vector<1x128xf32>
    %11 = arith.mulf %10, %9 : vector<1x128xf32>
    %12 = vector.broadcast %11 : vector<1x128xf32> to vector<2x128xf32>
    %13 = arith.addf %8, %12 : vector<2x128xf32>
    %14 = math.tanh %13 : vector<2x128xf32>
    %15 = arith.truncf %14 : vector<2x128xf32> to vector<2x128xbf16>
    %c0_8 = arith.constant 0 : index
    %c0_9 = arith.constant 0 : index
    %16 = vector.load %arg6[%c0_8, %c0_9] : memref<128x1024xbf16, #tpu.memory_space<vmem>>, vector<128x1024xbf16>
    %cst_10 = arith.constant dense<0.000000e+00> : vector<2x1024xf32>
    %17 = tpu.matmul %15, %16, %cst_10 {dimension_numbers = #tpu.dot_dimension_numbers<[1], [0], [0], [1], [0, 0, 1, 1], [], []>} : vector<2x128xbf16>, vector<128x1024xbf16>, vector<2x1024xf32> -> vector<2x1024xf32>
    %c0_11 = arith.constant 0 : index
    %c0_12 = arith.constant 0 : index
    %18 = vector.load %arg7[%c0_11, %c0_12] : memref<1x1024xf32, #tpu.memory_space<vmem>>, vector<1x1024xf32>
    %19 = vector.broadcast %18 : vector<1x1024xf32> to vector<2x1024xf32>
    %20 = arith.addf %17, %19 : vector<2x1024xf32>
    %c0_13 = arith.constant 0 : index
    %c0_14 = arith.constant 0 : index
    %c0_15 = arith.constant 0 : index
    %21 = vector.load %arg8[%c0_13, %c0_14, %c0_15] : memref<1x2x1024xf32, #tpu.memory_space<vmem>>, vector<1x2x1024xf32>
    %22 = vector.shape_cast %21 : vector<1x2x1024xf32> to vector<2x1024xf32>
    %23 = vector.shape_cast %20 : vector<2x1024xf32> to vector<1x2x1024xf32>
    tpu.vector_store %arg8[%c0_13, %c0_14, %c0_15], %23 {strides = array<i32>} : memref<1x2x1024xf32, #tpu.memory_space<vmem>>, vector<1x2x1024xf32>,
    return
  }
  func.func @transform_0(%arg0: i32, %arg1: memref<8xf32, #tpu.memory_space<smem>>) -> (i32, i32, i32) {
    %c0_i32 = arith.constant 0 : i32
    %c0_i32_0 = arith.constant 0 : i32
    %c0_i32_1 = arith.constant 0 : i32
    return %arg0, %c0_i32, %c0_i32_0 : i32, i32, i32
  }
  func.func @transform_1(%arg0: i32, %arg1: memref<8xf32, #tpu.memory_space<smem>>) -> (i32, i32) {
    %c0_i32 = arith.constant 0 : i32
    %c0_i32_0 = arith.constant 0 : i32
    %c0_i32_1 = arith.constant 0 : i32
    return %c0_i32, %c0_i32_0 : i32, i32
  }
  func.func @transform_2(%arg0: i32, %arg1: memref<8xf32, #tpu.memory_space<smem>>) -> (i32, i32) {
    %c0_i32 = arith.constant 0 : i32
    %c0_i32_0 = arith.constant 0 : i32
    %c0_i32_1 = arith.constant 0 : i32
    return %c0_i32, %c0_i32_0 : i32, i32
  }
  func.func @transform_3(%arg0: i32, %arg1: memref<8xf32, #tpu.memory_space<smem>>) -> (i32, i32) {
    %c0_i32 = arith.constant 0 : i32
    %c0_i32_0 = arith.constant 0 : i32
    %c0_i32_1 = arith.constant 0 : i32
    return %c0_i32, %c0_i32_0 : i32, i32
  }
  func.func @transform_4(%arg0: i32, %arg1: memref<8xf32, #tpu.memory_space<smem>>) -> (i32, i32) {
    %c0_i32 = arith.constant 0 : i32
    %c0_i32_0 = arith.constant 0 : i32
    %c0_i32_1 = arith.constant 0 : i32
    return %c0_i32, %c0_i32_0 : i32, i32
  }
  func.func @transform_5(%arg0: i32, %arg1: memref<8xf32, #tpu.memory_space<smem>>) -> (i32, i32) {
    %c0_i32 = arith.constant 0 : i32
    %c0_i32_0 = arith.constant 0 : i32
    %c0_i32_1 = arith.constant 0 : i32
    return %c0_i32, %c0_i32_0 : i32, i32
  }
  func.func @transform_6(%arg0: i32, %arg1: memref<8xf32, #tpu.memory_space<smem>>) -> (i32, i32, i32) {
    %c0_i32 = arith.constant 0 : i32
    %c0_i32_0 = arith.constant 0 : i32
    %c0_i32_1 = arith.constant 0 : i32
    return %arg0, %c0_i32, %c0_i32_0 : i32, i32, i32
  }
}

</mosaic_0001>

<llo_original>
// kernel: tpu_custom_call.1
$region0: #{tpu_custom_call.1}
  #allocation0 [shape = 'u32[]', space=smem, size = 0x4, offset = 0x4, fixed_abs, tag = 'smem constant byte address 0x4 - core index']
  #allocation1 [shape = 'u32[144,128]{1,0:T(1,128)}', space=vmem, size = 0x12000, scoped, tag = 'internal scratch']
  #allocation2 [shape = 's32[1]{0}', space=sflag, size = 0x4, scoped, tag = 'scoped memory for tpu_custom_call.1']
  #allocation3 [shape = 'u8[512]{0}', space=smem, size = 0x200, scoped, tag = 'prefetched SMEM operand 0']
  %s0 = inlined_call_operand.hbm [shape: f32[8], index: 0, kind: input, shape index: {}]
  %s1 = inlined_call_operand.hbm [shape: f32[8,2,1024], index: 1, kind: input, shape index: {}]
  %s2 = inlined_call_operand.vmem [shape: f32[2,128], index: 2, kind: input, shape index: {}]
  %s3 = inlined_call_operand.vmem [shape: f32[1,128], index: 3, kind: input, shape index: {}]
  %s4 = inlined_call_operand.hbm [shape: bf16[1024,128], index: 4, kind: input, shape index: {}]
  %s5 = inlined_call_operand.hbm [shape: bf16[128,1024], index: 5, kind: input, shape index: {}]
  %s6 = inlined_call_operand.vmem [shape: f32[1,1024], index: 6, kind: input, shape index: {}]
  %s7 = inlined_call_operand.hbm [shape: f32[8,2,1024], index: 7, kind: output, shape index: {}]
  %s8 = sld [smem:[#allocation0]]
  $region69: #{tpu_custom_call.1} parent=0
    _
  %s10 = ssub.s32 1, %s8
  %s11 = scalar_select 0, %s10, %s8
  %13 = dma.hbm_to_smem %s0, 16, [#allocation3], [#allocation2]
  %14 = dma.done [#allocation2], 16
  %15 = sfence
  $region1: #{tpu_custom_call.1} parent=0
    #allocation4 [shape = 'u8[16384]{0}', space=vmem, size = 0x4000, scoped, tag = 'input window, operand 1']
    #allocation5 [shape = 's32[2]{0}', space=sflag, size = 0x8, scoped, tag = 'scoped memory for tpu_custom_call.1']
    #allocation6 [shape = 's32[2]{0}', space=sflag, size = 0x8, scoped, tag = 'scoped memory for tpu_custom_call.1']
    #allocation7 [shape = 'u8[262144]{0}', space=vmem, size = 0x40000, scoped, tag = 'input window, operand 4, single buffered']
    #allocation8 [shape = 's32[1]{0}', space=sflag, size = 0x4, scoped, tag = 'scoped memory for tpu_custom_call.1']
    #allocation9 [shape = 'u8[262144]{0}', space=vmem, size = 0x40000, scoped, tag = 'input window, operand 5, single buffered']
    #allocation10 [shape = 'u8[16384]{0}', space=vmem, size = 0x4000, scoped, tag = 'output window, operand 0']
    %16 = vsyncpa [#allocation5], 0
    %s17 = scalar_lea.sflag [#allocation5], 1
    %18 = vsyncpa %s17, 0
    %19 = vsyncpa [#allocation8], 0
    %20 = vsyncpa [#allocation6], 0
    %s21 = scalar_lea.sflag [#allocation6], 1
    %22 = vsyncpa %s21, 0
    loop: start=0, step=1, limit=10
    $region2: #{tpu_custom_call.1} parent=1 // loop_pre_header
      _
    $region3: #{tpu_custom_call.1} parent=1 // loop_header
      %s24 = sphi 0, %s28
      %p25 = scmp.ge.s32.totalorder %s24, 10
      %s34 = sphi 0, %s36
      %s37 = sphi 0, %s34
      %s38 = sphi 0, %s37
      %s54 = sphi 0, %s38
      %s58 = sphi 0, %s58
      %s60 = sphi 0, %s58
      %s61 = sphi 0, %s60
      %s75 = sphi 0, %s61
      %s79 = sphi 0, %s79
      %s81 = sphi 0, %s79
      %s82 = sphi 0, %s81
      %s96 = sphi 0, %s82
      %s100 = sphi 0, %s100
      %s102 = sphi 0, %s100
      %s103 = sphi 0, %s102
      %s117 = sphi 0, %s103
      %s121 = sphi 0, %s121
      %s123 = sphi 0, %s121
      %s124 = sphi 0, %s123
      %s138 = sphi 0, %s124
      %s142 = sphi 0, %s142
      %s144 = sphi 0, %s142
      %s145 = sphi 0, %s144
      %s159 = sphi 0, %s145
      %s165 = sphi 0, %s167
      %s168 = sphi 0, %s165
      %s169 = sphi 0, %s168
      %s185 = sphi 0, %s169
    $region4: #{tpu_custom_call.1} parent=1 // loop_header_branch
      %27 = sbr.rel (%p25) target = $region8
    $region5: #{tpu_custom_call.1} parent=1 // loop_body
      %s29 = ssub.s32 %s24, 1
      %s30 = ssub.s32 %s24, 2
      %s31 = sadd.s32 %s24, 1
      %s32 = ssub.s32 %s24, %s31
      %p33 = scmp.eq.s32.totalorder %s32, 0
      %s35 = sadd.s32 %s34, 1
      %s36 = scalar_select %p33, %s34, %s35
      %p39 = pneg %p33
      %p40 = scmp.eq.s32.totalorder %s24, 7
      %p41 = por %p39, %p40
      %p42 = scmp.ne.s32.totalorder %s34, %s37
      %p43 = scmp.eq.s32.totalorder %s24, 0
      %p44 = por %p42, %p43
      %p45 = scmp.ne.s32.totalorder %s34, %s37
      %p46 = scmp.eq.s32.totalorder %s29, 7
      %p47 = por %p45, %p46
      %p48 = scmp.ne.s32.totalorder %s37, %s38
      %p49 = scmp.eq.s32.totalorder %s29, 0
      %p50 = por %p48, %p49
      %p51 = scmp.ne.s32.totalorder %s37, %s38
      %p52 = scmp.eq.s32.totalorder %s30, 7
      %p53 = por %p51, %p52
      %p55 = scmp.ne.s32.totalorder %s38, %s54
      %p56 = scmp.eq.s32.totalorder %s30, 0
      %p57 = por %p55, %p56
      %s59 = sadd.s32 %s58, 1
      %p62 = scmp.eq.s32.totalorder %s24, 7
      %p63 = scmp.ne.s32.totalorder %s58, %s60
      %p64 = scmp.eq.s32.totalorder %s24, 0
      %p65 = por %p63, %p64
      %p66 = scmp.ne.s32.totalorder %s58, %s60
      %p67 = scmp.eq.s32.totalorder %s29, 7
      %p68 = por %p66, %p67
      %p69 = scmp.ne.s32.totalorder %s60, %s61
      %p70 = scmp.eq.s32.totalorder %s29, 0
      %p71 = por %p69, %p70
      %p72 = scmp.ne.s32.totalorder %s60, %s61
      %p73 = scmp.eq.s32.totalorder %s30, 7
      %p74 = por %p72, %p73
      %p76 = scmp.ne.s32.totalorder %s61, %s75
      %p77 = scmp.eq.s32.totalorder %s30, 0
      %p78 = por %p76, %p77
      %s80 = sadd.s32 %s79, 1
      %p83 = scmp.eq.s32.totalorder %s24, 7
      %p84 = scmp.ne.s32.totalorder %s79, %s81
      %p85 = scmp.eq.s32.totalorder %s24, 0
      %p86 = por %p84, %p85
      %p87 = scmp.ne.s32.totalorder %s79, %s81
      %p88 = scmp.eq.s32.totalorder %s29, 7
      %p89 = por %p87, %p88
      %p90 = scmp.ne.s32.totalorder %s81, %s82
      %p91 = scmp.eq.s32.totalorder %s29, 0
      %p92 = por %p90, %p91
      %p93 = scmp.ne.s32.totalorder %s81, %s82
      %p94 = scmp.eq.s32.totalorder %s30, 7
      %p95 = por %p93, %p94
      %p97 = scmp.ne.s32.totalorder %s82, %s96
      %p98 = scmp.eq.s32.totalorder %s30, 0
      %p99 = por %p97, %p98
      %s101 = sadd.s32 %s100, 1
      %p104 = scmp.eq.s32.totalorder %s24, 7
      %p105 = scmp.ne.s32.totalorder %s100, %s102
      %p106 = scmp.eq.s32.totalorder %s24, 0
      %p107 = por %p105, %p106
      %p108 = scmp.ne.s32.totalorder %s100, %s102
      %p109 = scmp.eq.s32.totalorder %s29, 7
      %p110 = por %p108, %p109
      %p111 = scmp.ne.s32.totalorder %s102, %s103
      %p112 = scmp.eq.s32.totalorder %s29, 0
      %p113 = por %p111, %p112
      %p114 = scmp.ne.s32.totalorder %s102, %s103
      %p115 = scmp.eq.s32.totalorder %s30, 7
      %p116 = por %p114, %p115
      %p118 = scmp.ne.s32.totalorder %s103, %s117
      %p119 = scmp.eq.s32.totalorder %s30, 0
      %p120 = por %p118, %p119
      %s122 = sadd.s32 %s121, 1
      %p125 = scmp.eq.s32.totalorder %s24, 7
      %p126 = scmp.ne.s32.totalorder %s121, %s123
      %p127 = scmp.eq.s32.totalorder %s24, 0
      %p128 = por %p126, %p127
      %p129 = scmp.ne.s32.totalorder %s121, %s123
      %p130 = scmp.eq.s32.totalorder %s29, 7
      %p131 = por %p129, %p130
      %p132 = scmp.ne.s32.totalorder %s123, %s124
      %p133 = scmp.eq.s32.totalorder %s29, 0
      %p134 = por %p132, %p133
      %p135 = scmp.ne.s32.totalorder %s123, %s124
      %p136 = scmp.eq.s32.totalorder %s30, 7
      %p137 = por %p135, %p136
      %p139 = scmp.ne.s32.totalorder %s124, %s138
      %p140 = scmp.eq.s32.totalorder %s30, 0
      %p141 = por %p139, %p140
      %s143 = sadd.s32 %s142, 1
      %p146 = scmp.eq.s32.totalorder %s24, 7
      %p147 = scmp.ne.s32.totalorder %s142, %s144
      %p148 = scmp.eq.s32.totalorder %s24, 0
      %p149 = por %p147, %p148
      %p150 = scmp.ne.s32.totalorder %s142, %s144
      %p151 = scmp.eq.s32.totalorder %s29, 7
      %p152 = por %p150, %p151
      %p153 = scmp.ne.s32.totalorder %s144, %s145
      %p154 = scmp.eq.s32.totalorder %s29, 0
      %p155 = por %p153, %p154
      %p156 = scmp.ne.s32.totalorder %s144, %s145
      %p157 = scmp.eq.s32.totalorder %s30, 7
      %p158 = por %p156, %p157
      %p160 = scmp.ne.s32.totalorder %s145, %s159
      %p161 = scmp.eq.s32.totalorder %s30, 0
      %p162 = por %p160, %p161
      %s163 = ssub.s32 %s24, %s31
      %p164 = scmp.eq.s32.totalorder %s163, 0
      %s166 = sadd.s32 %s165, 1
      %s167 = scalar_select %p164, %s165, %s166
      %p170 = pneg %p164
      %p171 = scmp.eq.s32.totalorder %s24, 7
      %p172 = por %p170, %p171
      %p173 = scmp.ne.s32.totalorder %s165, %s168
      %p174 = scmp.eq.s32.totalorder %s24, 0
      %p175 = por %p173, %p174
      %p176 = scmp.ne.s32.totalorder %s165, %s168
      %p177 = scmp.eq.s32.totalorder %s29, 7
      %p178 = por %p176, %p177
      %p179 = scmp.ne.s32.totalorder %s168, %s169
      %p180 = scmp.eq.s32.totalorder %s29, 0
      %p181 = por %p179, %p180
      %p182 = scmp.ne.s32.totalorder %s168, %s169
      %p183 = scmp.eq.s32.totalorder %s30, 7
      %p184 = por %p182, %p183
      %p186 = scmp.ne.s32.totalorder %s169, %s185
      %p187 = scmp.eq.s32.totalorder %s30, 0
      %p188 = por %p186, %p187
      %p189 = scmp.le.s32.totalorder 1, %s24
      %p190 = scmp.lt.s32.totalorder %s24, 9
      %p191 = pnand %p189, %p190
      %p192 = pneg %p191
      // Predicated region
      $region9: #{tpu_custom_call.1} parent=5 // pred_check
        _
      $region10: #{tpu_custom_call.1} parent=5 // pred_check_branch
        %194 = sbr.rel (%p191) target = $region12
      $region11: #{tpu_custom_call.1} parent=5 // pred_region
        %s195 = ssub.s32 %s24, 1
        // Predicated region
        $region13: #{tpu_custom_call.1} parent=11 // pred_check
          %p196 = pneg %p71
        $region14: #{tpu_custom_call.1} parent=11 // pred_check_branch
          %198 = sbr.rel (%p196) target = $region16
        $region15: #{tpu_custom_call.1} parent=11 // pred_region
          _
        $region16: #{tpu_custom_call.1} parent=11 // pred_fallthru
          _
        // Predicated region
        $region17: #{tpu_custom_call.1} parent=11 // pred_check
          %p199 = pneg %p92
        $region18: #{tpu_custom_call.1} parent=11 // pred_check_branch
          %201 = sbr.rel (%p199) target = $region20
        $region19: #{tpu_custom_call.1} parent=11 // pred_region
          _
        $region20: #{tpu_custom_call.1} parent=11 // pred_fallthru
          _
        // Predicated region
        $region21: #{tpu_custom_call.1} parent=11 // pred_check
          %p202 = pneg %p113
        $region22: #{tpu_custom_call.1} parent=11 // pred_check_branch
          %204 = sbr.rel (%p202) target = $region24
        $region23: #{tpu_custom_call.1} parent=11 // pred_region
          %s206 = ssub.s32 8192, 8192
          %207 = vsyncadd [#allocation8], %s206
          %s208 = sshll.u32 [#allocation7], 4
          %s209 = int_to_ptr.vmem [resolvable:$true] %s208
          %214 = dma.hbm_to_vmem [thread:$0]  %s4, 8192, %s209, [#allocation8], 64, 64, 4
        $region24: #{tpu_custom_call.1} parent=11 // pred_fallthru
          _
        // Predicated region
        $region25: #{tpu_custom_call.1} parent=11 // pred_check
          %p215 = pneg %p134
        $region26: #{tpu_custom_call.1} parent=11 // pred_check_branch
          %217 = sbr.rel (%p215) target = $region28
        $region27: #{tpu_custom_call.1} parent=11 // pred_region
          %s219 = ssub.s32 8192, 8192
          %220 = vsyncadd [#allocation8], %s219
          %s221 = sshll.u32 [#allocation9], 4
          %s222 = int_to_ptr.vmem [resolvable:$true] %s221
          %227 = dma.hbm_to_vmem [thread:$0]  %s5, 8192, %s222, [#allocation8], 512, 512, 32
        $region28: #{tpu_custom_call.1} parent=11 // pred_fallthru
          _
        // Predicated region
        $region29: #{tpu_custom_call.1} parent=11 // pred_check
          %p228 = pneg %p155
        $region30: #{tpu_custom_call.1} parent=11 // pred_check_branch
          %230 = sbr.rel (%p228) target = $region32
        $region31: #{tpu_custom_call.1} parent=11 // pred_region
          _
        $region32: #{tpu_custom_call.1} parent=11 // pred_fallthru
          _
      $region12: #{tpu_custom_call.1} parent=5 // pred_fallthru
        _
      %p231 = scmp.lt.s32.totalorder %s24, 8
      // Predicated region
      $region33: #{tpu_custom_call.1} parent=5 // pred_check
        %p232 = pneg %p231
      $region34: #{tpu_custom_call.1} parent=5 // pred_check_branch
        %234 = sbr.rel (%p232) target = $region36
      $region35: #{tpu_custom_call.1} parent=5 // pred_region
        // Predicated region
        $region37: #{tpu_custom_call.1} parent=35 // pred_check
          %p235 = pneg %p44
        $region38: #{tpu_custom_call.1} parent=35 // pred_check_branch
          %237 = sbr.rel (%p235) target = $region40
        $region39: #{tpu_custom_call.1} parent=35 // pred_region
          %s238 = sand.u32 %s34, 1
          %s239 = scalar_lea.sflag [#allocation5], %s238
          %s240 = sand.u32 %s34, 1
          %s241 = smul.addr %s240, 16
          %s242 = scalar_lea.vmem [#allocation4], %s241
          %s244 = ssub.s32 256, 256
          %245 = vsyncadd %s239, %s244
          %s246 = smul.addr %s24, 8
          %s247 = smul.addr %s246, 32
          %s248 = scalar_lea.hbm %s1, %s247
          %s250 = sshll.u32 %s242, 4
          %s251 = int_to_ptr.vmem [resolvable:$true] %s250
          %253 = dma.hbm_to_vmem [thread:$0]  %s248, 256, %s251, %s239
        $region40: #{tpu_custom_call.1} parent=35 // pred_fallthru
          _
      $region36: #{tpu_custom_call.1} parent=5 // pred_fallthru
        _
      %p254 = scmp.le.s32.totalorder 1, %s24
      %p255 = scmp.lt.s32.totalorder %s24, 9
      %p256 = pnand %p254, %p255
      %p257 = pneg %p256
      // Predicated region
      $region41: #{tpu_custom_call.1} parent=5 // pred_check
        _
      $region42: #{tpu_custom_call.1} parent=5 // pred_check_branch
        %259 = sbr.rel (%p256) target = $region44
      $region43: #{tpu_custom_call.1} parent=5 // pred_region
        %s260 = ssub.s32 %s24, 1
        %s261 = sand.u32 %s37, 1
        %s262 = scalar_lea.sflag [#allocation5], %s261
        %s263 = sand.u32 %s37, 1
        %s264 = smul.addr %s263, 16
        %s265 = scalar_lea.vmem [#allocation4], %s264
        // Predicated region
        $region45: #{tpu_custom_call.1} parent=43 // pred_check
          %p266 = pneg %p50
        $region46: #{tpu_custom_call.1} parent=43 // pred_check_branch
          %268 = sbr.rel (%p266) target = $region48
        $region47: #{tpu_custom_call.1} parent=43 // pred_region
          %269 = dma.done %s262, 256
        $region48: #{tpu_custom_call.1} parent=43 // pred_fallthru
          _
        // Predicated region
        $region49: #{tpu_custom_call.1} parent=43 // pred_check
          %p270 = pneg %p113
        $region50: #{tpu_custom_call.1} parent=43 // pred_check_branch
          %272 = sbr.rel (%p270) target = $region52
        $region51: #{tpu_custom_call.1} parent=43 // pred_region
          %273 = dma.done [#allocation8], 8192
        $region52: #{tpu_custom_call.1} parent=43 // pred_fallthru
          _
        // Predicated region
        $region53: #{tpu_custom_call.1} parent=43 // pred_check
          %p274 = pneg %p134
        $region54: #{tpu_custom_call.1} parent=43 // pred_check_branch
          %276 = sbr.rel (%p274) target = $region56
        $region55: #{tpu_custom_call.1} parent=43 // pred_region
          %277 = dma.done [#allocation8], 8192
        $region56: #{tpu_custom_call.1} parent=43 // pred_fallthru
          _
        %s278 = sand.u32 %s37, 1
        %s279 = scalar_lea.sflag [#allocation5], %s278
        %s280 = sand.u32 %s37, 1
        %s281 = smul.addr %s280, 16
        %s282 = scalar_lea.vmem [#allocation4], %s281
        %p283 = pneg %p50
        %p284 = pneg %p47
        %p285 = pneg %p71
        %p286 = pneg %p68
        %p287 = pneg %p92
        %p288 = pneg %p89
        %p289 = pneg %p113
        %p290 = pneg %p110
        %p291 = pneg %p134
        %p292 = pneg %p131
        %p293 = pneg %p155
        %p294 = pneg %p152
        %p295 = pneg %p181
        %p296 = pneg %p178
        %s297 = sand.u32 %s168, 1
        %s298 = scalar_lea.sflag [#allocation6], %s297
        %s299 = sand.u32 %s168, 1
        %s300 = smul.addr %s299, 16
        %s301 = scalar_lea.vmem [#allocation10], %s300
        %s303 = sld [smem:[#allocation3 + %s29]]
        %v304 = vld [vmem:[%s265] sm:$0xff]
        %v305 = vld [vmem:[%s265 + $0x8] sm:$0xff]
        %v308 = vcombine.high %v304, %v304
        %v310 = vunpack.c.l.s4 1983009808
        %v311 = vunpack.c.0.s8 %v310
        %v312 = vlaneseq
        %v313 = vshrl.u32 %v312, 7
        %v314 = vsub.s32 %v311, %v313
        %v315 = vrot.slane %v304, %v314
        %v317 = vunpack.c.l.s4 1983009808
        %v318 = vunpack.c.0.s8 %v317
        %v319 = vlaneseq
        %v320 = vshrl.u32 %v319, 7
        %v321 = vsub.s32 %v318, %v320
        %v322 = vrot.slane %v308, %v321
        %v323 = vcombine.high %v315, %v315
        %v324 = vcombine.high %v322, %v322
        %v325 = vcombine.high %v305, %v305
        %v327 = vunpack.c.l.s4 1983009808
        %v328 = vunpack.c.0.s8 %v327
        %v329 = vlaneseq
        %v330 = vshrl.u32 %v329, 7
        %v331 = vsub.s32 %v328, %v330
        %v332 = vrot.slane %v305, %v331
        %v334 = vunpack.c.l.s4 1983009808
        %v335 = vunpack.c.0.s8 %v334
        %v336 = vlaneseq
        %v337 = vshrl.u32 %v336, 7
        %v338 = vsub.s32 %v335, %v337
        %v339 = vrot.slane %v325, %v338
        %v340 = vcombine.high %v332, %v332
        %v341 = vcombine.high %v339, %v339
        %v350 = vpack.c.bf16 %v315, %v315
        %v351 = vpack.c.bf16 %v323, %v323
        %v352 = vpack.c.bf16 %v322, %v322
        %v353 = vpack.c.bf16 %v324, %v324
        %v354 = vpack.c.bf16 %v332, %v332
        %v355 = vpack.c.bf16 %v340, %v340
        %v356 = vpack.c.bf16 %v339, %v339
        %v357 = vpack.c.bf16 %v341, %v341
        %v358 = vld [vmem:[#allocation7] sm:$0xf]
        %v359 = vld [vmem:[#allocation7 + $0x4] sm:$0xf]
        %v360 = vld [vmem:[#allocation7 + $0x8] sm:$0xf]
        %v361 = vld [vmem:[#allocation7 + $0xc] sm:$0xf]
        %v362 = vld [vmem:[#allocation7 + $0x10] sm:$0xf]
        %v363 = vld [vmem:[#allocation7 + $0x14] sm:$0xf]
        %v364 = vld [vmem:[#allocation7 + $0x18] sm:$0xf]
        %v365 = vld [vmem:[#allocation7 + $0x1c] sm:$0xf]
        %v366 = vld [vmem:[#allocation7 + $0x20] sm:$0xf]
        %v367 = vld [vmem:[#allocation7 + $0x24] sm:$0xf]
        %v368 = vld [vmem:[#allocation7 + $0x28] sm:$0xf]
        %v369 = vld [vmem:[#allocation7 + $0x2c] sm:$0xf]
        %v370 = vld [vmem:[#allocation7 + $0x30] sm:$0xf]
        %v371 = vld [vmem:[#allocation7 + $0x34] sm:$0xf]
        %v372 = vld [vmem:[#allocation7 + $0x38] sm:$0xf]
        %v373 = vld [vmem:[#allocation7 + $0x3c] sm:$0xf]
        %v374 = vld [vmem:[#allocation7 + $0x40] sm:$0xf]
        %v375 = vld [vmem:[#allocation7 + $0x44] sm:$0xf]
        %v376 = vld [vmem:[#allocation7 + $0x48] sm:$0xf]
        %v377 = vld [vmem:[#allocation7 + $0x4c] sm:$0xf]
        %v378 = vld [vmem:[#allocation7 + $0x50] sm:$0xf]
        %v379 = vld [vmem:[#allocation7 + $0x54] sm:$0xf]
        %v380 = vld [vmem:[#allocation7 + $0x58] sm:$0xf]
        %v381 = vld [vmem:[#allocation7 + $0x5c] sm:$0xf]
        %v382 = vld [vmem:[#allocation7 + $0x60] sm:$0xf]
        %v383 = vld [vmem:[#allocation7 + $0x64] sm:$0xf]
        %v384 = vld [vmem:[#allocation7 + $0x68] sm:$0xf]
        %v385 = vld [vmem:[#allocation7 + $0x6c] sm:$0xf]
        %v386 = vld [vmem:[#allocation7 + $0x70] sm:$0xf]
        %v387 = vld [vmem:[#allocation7 + $0x74] sm:$0xf]
        %v388 = vld [vmem:[#allocation7 + $0x78] sm:$0xf]
        %v389 = vld [vmem:[#allocation7 + $0x7c] sm:$0xf]
        %v390 = vld [vmem:[#allocation7 + $0x80] sm:$0xf]
        %v391 = vld [vmem:[#allocation7 + $0x84] sm:$0xf]
        %v392 = vld [vmem:[#allocation7 + $0x88] sm:$0xf]
        %v393 = vld [vmem:[#allocation7 + $0x8c] sm:$0xf]
        %v394 = vld [vmem:[#allocation7 + $0x90] sm:$0xf]
        %v395 = vld [vmem:[#allocation7 + $0x94] sm:$0xf]
        %v396 = vld [vmem:[#allocation7 + $0x98] sm:$0xf]
        %v397 = vld [vmem:[#allocation7 + $0x9c] sm:$0xf]
        %v398 = vld [vmem:[#allocation7 + $0xa0] sm:$0xf]
        %v399 = vld [vmem:[#allocation7 + $0xa4] sm:$0xf]
        %v400 = vld [vmem:[#allocation7 + $0xa8] sm:$0xf]
        %v401 = vld [vmem:[#allocation7 + $0xac] sm:$0xf]
        %v402 = vld [vmem:[#allocation7 + $0xb0] sm:$0xf]
        %v403 = vld [vmem:[#allocation7 + $0xb4] sm:$0xf]
        %v404 = vld [vmem:[#allocation7 + $0xb8] sm:$0xf]
        %v405 = vld [vmem:[#allocation7 + $0xbc] sm:$0xf]
        %v406 = vld [vmem:[#allocation7 + $0xc0] sm:$0xf]
        %v407 = vld [vmem:[#allocation7 + $0xc4] sm:$0xf]
        %v408 = vld [vmem:[#allocation7 + $0xc8] sm:$0xf]
        %v409 = vld [vmem:[#allocation7 + $0xcc] sm:$0xf]
        %v410 = vld [vmem:[#allocation7 + $0xd0] sm:$0xf]
        %v411 = vld [vmem:[#allocation7 + $0xd4] sm:$0xf]
        %v412 = vld [vmem:[#allocation7 + $0xd8] sm:$0xf]
        %v413 = vld [vmem:[#allocation7 + $0xdc] sm:$0xf]
        %v414 = vld [vmem:[#allocation7 + $0xe0] sm:$0xf]
        %v415 = vld [vmem:[#allocation7 + $0xe4] sm:$0xf]
        %v416 = vld [vmem:[#allocation7 + $0xe8] sm:$0xf]
        %v417 = vld [vmem:[#allocation7 + $0xec] sm:$0xf]
        %v418 = vld [vmem:[#allocation7 + $0xf0] sm:$0xf]
        %v419 = vld [vmem:[#allocation7 + $0xf4] sm:$0xf]
        %v420 = vld [vmem:[#allocation7 + $0xf8] sm:$0xf]
        %v421 = vld [vmem:[#allocation7 + $0xfc] sm:$0xf]
        %v422 = vld [vmem:[#allocation7 + $0x100] sm:$0xf]
        %v423 = vld [vmem:[#allocation7 + $0x104] sm:$0xf]
        %v424 = vld [vmem:[#allocation7 + $0x108] sm:$0xf]
        %v425 = vld [vmem:[#allocation7 + $0x10c] sm:$0xf]
        %v426 = vld [vmem:[#allocation7 + $0x110] sm:$0xf]
        %v427 = vld [vmem:[#allocation7 + $0x114] sm:$0xf]
        %v428 = vld [vmem:[#allocation7 + $0x118] sm:$0xf]
        %v429 = vld [vmem:[#allocation7 + $0x11c] sm:$0xf]
        %v430 = vld [vmem:[#allocation7 + $0x120] sm:$0xf]
        %v431 = vld [vmem:[#allocation7 + $0x124] sm:$0xf]
        %v432 = vld [vmem:[#allocation7 + $0x128] sm:$0xf]
        %v433 = vld [vmem:[#allocation7 + $0x12c] sm:$0xf]
        %v434 = vld [vmem:[#allocation7 + $0x130] sm:$0xf]
        %v435 = vld [vmem:[#allocation7 + $0x134] sm:$0xf]
        %v436 = vld [vmem:[#allocation7 + $0x138] sm:$0xf]
        %v437 = vld [vmem:[#allocation7 + $0x13c] sm:$0xf]
        %v438 = vld [vmem:[#allocation7 + $0x140] sm:$0xf]
        %v439 = vld [vmem:[#allocation7 + $0x144] sm:$0xf]
        %v440 = vld [vmem:[#allocation7 + $0x148] sm:$0xf]
        %v441 = vld [vmem:[#allocation7 + $0x14c] sm:$0xf]
        %v442 = vld [vmem:[#allocation7 + $0x150] sm:$0xf]
        %v443 = vld [vmem:[#allocation7 + $0x154] sm:$0xf]
        %v444 = vld [vmem:[#allocation7 + $0x158] sm:$0xf]
        %v445 = vld [vmem:[#allocation7 + $0x15c] sm:$0xf]
        %v446 = vld [vmem:[#allocation7 + $0x160] sm:$0xf]
        %v447 = vld [vmem:[#allocation7 + $0x164] sm:$0xf]
        %v448 = vld [vmem:[#allocation7 + $0x168] sm:$0xf]
        %v449 = vld [vmem:[#allocation7 + $0x16c] sm:$0xf]
        %v450 = vld [vmem:[#allocation7 + $0x170] sm:$0xf]
        %v451 = vld [vmem:[#allocation7 + $0x174] sm:$0xf]
        %v452 = vld [vmem:[#allocation7 + $0x178] sm:$0xf]
        %v453 = vld [vmem:[#allocation7 + $0x17c] sm:$0xf]
        %v454 = vld [vmem:[#allocation7 + $0x180] sm:$0xf]
        %v455 = vld [vmem:[#allocation7 + $0x184] sm:$0xf]
        %v456 = vld [vmem:[#allocation7 + $0x188] sm:$0xf]
        %v457 = vld [vmem:[#allocation7 + $0x18c] sm:$0xf]
        %v458 = vld [vmem:[#allocation7 + $0x190] sm:$0xf]
        %v459 = vld [vmem:[#allocation7 + $0x194] sm:$0xf]
        %v460 = vld [vmem:[#allocation7 + $0x198] sm:$0xf]
        %v461 = vld [vmem:[#allocation7 + $0x19c] sm:$0xf]
        %v462 = vld [vmem:[#allocation7 + $0x1a0] sm:$0xf]
        %v463 = vld [vmem:[#allocation7 + $0x1a4] sm:$0xf]
        %v464 = vld [vmem:[#allocation7 + $0x1a8] sm:$0xf]
        %v465 = vld [vmem:[#allocation7 + $0x1ac] sm:$0xf]
        %v466 = vld [vmem:[#allocation7 + $0x1b0] sm:$0xf]
        %v467 = vld [vmem:[#allocation7 + $0x1b4] sm:$0xf]
        %v468 = vld [vmem:[#allocation7 + $0x1b8] sm:$0xf]
        %v469 = vld [vmem:[#allocation7 + $0x1bc] sm:$0xf]
        %v470 = vld [vmem:[#allocation7 + $0x1c0] sm:$0xf]
        %v471 = vld [vmem:[#allocation7 + $0x1c4] sm:$0xf]
        %v472 = vld [vmem:[#allocation7 + $0x1c8] sm:$0xf]
        %v473 = vld [vmem:[#allocation7 + $0x1cc] sm:$0xf]
        %v474 = vld [vmem:[#allocation7 + $0x1d0] sm:$0xf]
        %v475 = vld [vmem:[#allocation7 + $0x1d4] sm:$0xf]
        %v476 = vld [vmem:[#allocation7 + $0x1d8] sm:$0xf]
        %v477 = vld [vmem:[#allocation7 + $0x1dc] sm:$0xf]
        %v478 = vld [vmem:[#allocation7 + $0x1e0] sm:$0xf]
        %v479 = vld [vmem:[#allocation7 + $0x1e4] sm:$0xf]
        %v480 = vld [vmem:[#allocation7 + $0x1e8] sm:$0xf]
        %v481 = vld [vmem:[#allocation7 + $0x1ec] sm:$0xf]
        %v482 = vld [vmem:[#allocation7 + $0x1f0] sm:$0xf]
        %v483 = vld [vmem:[#allocation7 + $0x1f4] sm:$0xf]
        %v484 = vld [vmem:[#allocation7 + $0x1f8] sm:$0xf]
        %v485 = vld [vmem:[#allocation7 + $0x1fc] sm:$0xf]
        %v486 = vld [vmem:[%s2] sm:$0x3]
        %v615 = vunpack.c.l.b16 %v358
        %v616 = vunpack.c.l.b16 %v359
        %v617 = vunpack.c.l.b16 %v360
        %v618 = vunpack.c.l.b16 %v361
        %v619 = vunpack.c.l.b16 %v362
        %v620 = vunpack.c.l.b16 %v363
        %v621 = vunpack.c.l.b16 %v364
        %v622 = vunpack.c.l.b16 %v365
        %v623 = vunpack.c.l.b16 %v366
        %v624 = vunpack.c.l.b16 %v367
        %v625 = vunpack.c.l.b16 %v368
        %v626 = vunpack.c.l.b16 %v369
        %v627 = vunpack.c.l.b16 %v370
        %v628 = vunpack.c.l.b16 %v371
        %v629 = vunpack.c.l.b16 %v372
        %v630 = vunpack.c.l.b16 %v373
        %v631 = vunpack.c.l.b16 %v374
        %v632 = vunpack.c.l.b16 %v375
        %v633 = vunpack.c.l.b16 %v376
        %v634 = vunpack.c.l.b16 %v377
        %v635 = vunpack.c.l.b16 %v378
        %v636 = vunpack.c.l.b16 %v379
        %v637 = vunpack.c.l.b16 %v380
        %v638 = vunpack.c.l.b16 %v381
        %v639 = vunpack.c.l.b16 %v382
        %v640 = vunpack.c.l.b16 %v383
        %v641 = vunpack.c.l.b16 %v384
        %v642 = vunpack.c.l.b16 %v385
        %v643 = vunpack.c.l.b16 %v386
        %v644 = vunpack.c.l.b16 %v387
        %v645 = vunpack.c.l.b16 %v388
        %v646 = vunpack.c.l.b16 %v389
        %v647 = vunpack.c.l.b16 %v390
        %v648 = vunpack.c.l.b16 %v391
        %v649 = vunpack.c.l.b16 %v392
        %v650 = vunpack.c.l.b16 %v393
        %v651 = vunpack.c.l.b16 %v394
        %v652 = vunpack.c.l.b16 %v395
        %v653 = vunpack.c.l.b16 %v396
        %v654 = vunpack.c.l.b16 %v397
        %v655 = vunpack.c.l.b16 %v398
        %v656 = vunpack.c.l.b16 %v399
        %v657 = vunpack.c.l.b16 %v400
        %v658 = vunpack.c.l.b16 %v401
        %v659 = vunpack.c.l.b16 %v402
        %v660 = vunpack.c.l.b16 %v403
        %v661 = vunpack.c.l.b16 %v404
        %v662 = vunpack.c.l.b16 %v405
        %v663 = vunpack.c.l.b16 %v406
        %v664 = vunpack.c.l.b16 %v407
        %v665 = vunpack.c.l.b16 %v408
        %v666 = vunpack.c.l.b16 %v409
        %v667 = vunpack.c.l.b16 %v410
        %v668 = vunpack.c.l.b16 %v411
        %v669 = vunpack.c.l.b16 %v412
        %v670 = vunpack.c.l.b16 %v413
        %v671 = vunpack.c.l.b16 %v414
        %v672 = vunpack.c.l.b16 %v415
        %v673 = vunpack.c.l.b16 %v416
        %v674 = vunpack.c.l.b16 %v417
        %v675 = vunpack.c.l.b16 %v418
        %v676 = vunpack.c.l.b16 %v419
        %v677 = vunpack.c.l.b16 %v420
        %v678 = vunpack.c.l.b16 %v421
        %v679 = vunpack.c.l.b16 %v422
        %v680 = vunpack.c.l.b16 %v423
        %v681 = vunpack.c.l.b16 %v424
        %v682 = vunpack.c.l.b16 %v425
        %v683 = vunpack.c.l.b16 %v426
        %v684 = vunpack.c.l.b16 %v427
        %v685 = vunpack.c.l.b16 %v428
        %v686 = vunpack.c.l.b16 %v429
        %v687 = vunpack.c.l.b16 %v430
        %v688 = vunpack.c.l.b16 %v431
        %v689 = vunpack.c.l.b16 %v432
        %v690 = vunpack.c.l.b16 %v433
        %v691 = vunpack.c.l.b16 %v434
        %v692 = vunpack.c.l.b16 %v435
        %v693 = vunpack.c.l.b16 %v436
        %v694 = vunpack.c.l.b16 %v437
        %v695 = vunpack.c.l.b16 %v438
        %v696 = vunpack.c.l.b16 %v439
        %v697 = vunpack.c.l.b16 %v440
        %v698 = vunpack.c.l.b16 %v441
        %v699 = vunpack.c.l.b16 %v442
        %v700 = vunpack.c.l.b16 %v443
        %v701 = vunpack.c.l.b16 %v444
        %v702 = vunpack.c.l.b16 %v445
        %v703 = vunpack.c.l.b16 %v446
        %v704 = vunpack.c.l.b16 %v447
        %v705 = vunpack.c.l.b16 %v448
        %v706 = vunpack.c.l.b16 %v449
        %v707 = vunpack.c.l.b16 %v450
        %v708 = vunpack.c.l.b16 %v451
        %v709 = vunpack.c.l.b16 %v452
        %v710 = vunpack.c.l.b16 %v453
        %v711 = vunpack.c.l.b16 %v454
        %v712 = vunpack.c.l.b16 %v455
        %v713 = vunpack.c.l.b16 %v456
        %v714 = vunpack.c.l.b16 %v457
        %v715 = vunpack.c.l.b16 %v458
        %v716 = vunpack.c.l.b16 %v459
        %v717 = vunpack.c.l.b16 %v460
        %v718 = vunpack.c.l.b16 %v461
        %v719 = vunpack.c.l.b16 %v462
        %v720 = vunpack.c.l.b16 %v463
        %v721 = vunpack.c.l.b16 %v464
        %v722 = vunpack.c.l.b16 %v465
        %v723 = vunpack.c.l.b16 %v466
        %v724 = vunpack.c.l.b16 %v467
        %v725 = vunpack.c.l.b16 %v468
        %v726 = vunpack.c.l.b16 %v469
        %v727 = vunpack.c.l.b16 %v470
        %v728 = vunpack.c.l.b16 %v471
        %v729 = vunpack.c.l.b16 %v472
        %v730 = vunpack.c.l.b16 %v473
        %v731 = vunpack.c.l.b16 %v474
        %v732 = vunpack.c.l.b16 %v475
        %v733 = vunpack.c.l.b16 %v476
        %v734 = vunpack.c.l.b16 %v477
        %v735 = vunpack.c.l.b16 %v478
        %v736 = vunpack.c.l.b16 %v479
        %v737 = vunpack.c.l.b16 %v480
        %v738 = vunpack.c.l.b16 %v481
        %v739 = vunpack.c.l.b16 %v482
        %v740 = vunpack.c.l.b16 %v483
        %v741 = vunpack.c.l.b16 %v484
        %v742 = vunpack.c.l.b16 %v485
        %v743 = vpack.c.b16 %v616, %v615
        %v744 = vpack.c.b16 %v618, %v617
        %v745 = vpack.c.b16 %v620, %v619
        %v746 = vpack.c.b16 %v622, %v621
        %v747 = vpack.c.b16 %v624, %v623
        %v748 = vpack.c.b16 %v626, %v625
        %v749 = vpack.c.b16 %v628, %v627
        %v750 = vpack.c.b16 %v630, %v629
        %v751 = vpack.c.b16 %v632, %v631
        %v752 = vpack.c.b16 %v634, %v633
        %v753 = vpack.c.b16 %v636, %v635
        %v754 = vpack.c.b16 %v638, %v637
        %v755 = vpack.c.b16 %v640, %v639
        %v756 = vpack.c.b16 %v642, %v641
        %v757 = vpack.c.b16 %v644, %v643
        %v758 = vpack.c.b16 %v646, %v645
        %v759 = vpack.c.b16 %v648, %v647
        %v760 = vpack.c.b16 %v650, %v649
        %v761 = vpack.c.b16 %v652, %v651
        %v762 = vpack.c.b16 %v654, %v653
        %v763 = vpack.c.b16 %v656, %v655
        %v764 = vpack.c.b16 %v658, %v657
        %v765 = vpack.c.b16 %v660, %v659
        %v766 = vpack.c.b16 %v662, %v661
        %v767 = vpack.c.b16 %v664, %v663
        %v768 = vpack.c.b16 %v666, %v665
        %v769 = vpack.c.b16 %v668, %v667
        %v770 = vpack.c.b16 %v670, %v669
        %v771 = vpack.c.b16 %v672, %v671
        %v772 = vpack.c.b16 %v674, %v673
        %v773 = vpack.c.b16 %v676, %v675
        %v774 = vpack.c.b16 %v678, %v677
        %v775 = vpack.c.b16 %v680, %v679
        %v776 = vpack.c.b16 %v682, %v681
        %v777 = vpack.c.b16 %v684, %v683
        %v778 = vpack.c.b16 %v686, %v685
        %v779 = vpack.c.b16 %v688, %v687
        %v780 = vpack.c.b16 %v690, %v689
        %v781 = vpack.c.b16 %v692, %v691
        %v782 = vpack.c.b16 %v694, %v693
        %v783 = vpack.c.b16 %v696, %v695
        %v784 = vpack.c.b16 %v698, %v697
        %v785 = vpack.c.b16 %v700, %v699
        %v786 = vpack.c.b16 %v702, %v701
        %v787 = vpack.c.b16 %v704, %v703
        %v788 = vpack.c.b16 %v706, %v705
        %v789 = vpack.c.b16 %v708, %v707
        %v790 = vpack.c.b16 %v710, %v709
        %v791 = vpack.c.b16 %v712, %v711
        %v792 = vpack.c.b16 %v714, %v713
        %v793 = vpack.c.b16 %v716, %v715
        %v794 = vpack.c.b16 %v718, %v717
        %v795 = vpack.c.b16 %v720, %v719
        %v796 = vpack.c.b16 %v722, %v721
        %v797 = vpack.c.b16 %v724, %v723
        %v798 = vpack.c.b16 %v726, %v725
        %v799 = vpack.c.b16 %v728, %v727
        %v800 = vpack.c.b16 %v730, %v729
        %v801 = vpack.c.b16 %v732, %v731
        %v802 = vpack.c.b16 %v734, %v733
        %v803 = vpack.c.b16 %v736, %v735
        %v804 = vpack.c.b16 %v738, %v737
        %v805 = vpack.c.b16 %v740, %v739
        %v806 = vpack.c.b16 %v742, %v741
        %871 = vmatprep.subr.bf16.mxu0 0
        %872 = vmatpush1.bf16.msra.mxu0 %v743
        %873 = vmatprep.subr.bf16.mxu0 0
        %874 = vmatpush1.bf16.msra.mxu0 %v744
        %875 = vmatprep.subr.bf16.mxu0 0
        %876 = vmatpush1.bf16.msra.mxu0 %v745
        %877 = vmatprep.subr.bf16.mxu0 0
        %878 = vmatpush1.bf16.msra.mxu0 %v746
        %879 = vmatprep.subr.bf16.mxu0 0
        %880 = vmatpush1.bf16.msra.mxu0 %v747
        %881 = vmatprep.subr.bf16.mxu0 0
        %882 = vmatpush1.bf16.msra.mxu0 %v748
        %883 = vmatprep.subr.bf16.mxu0 0
        %884 = vmatpush1.bf16.msra.mxu0 %v749
        %885 = vmatprep.subr.bf16.mxu0 0
        %886 = vmatpush1.bf16.msra.mxu0 %v750
        %887 = vmatprep.subr.bf16.mxu0 0
        %888 = vmatpush1.bf16.msra.mxu0 %v751
        %889 = vmatprep.subr.bf16.mxu0 0
        %890 = vmatpush1.bf16.msra.mxu0 %v752
        %891 = vmatprep.subr.bf16.mxu0 0
        %892 = vmatpush1.bf16.msra.mxu0 %v753
        %893 = vmatprep.subr.bf16.mxu0 0
        %894 = vmatpush1.bf16.msra.mxu0 %v754
        %895 = vmatprep.subr.bf16.mxu0 0
        %896 = vmatpush1.bf16.msra.mxu0 %v755
        %897 = vmatprep.subr.bf16.mxu0 0
        %898 = vmatpush1.bf16.msra.mxu0 %v756
        %899 = vmatprep.subr.bf16.mxu0 0
        %900 = vmatpush1.bf16.msra.mxu0 %v757
        %901 = vmatprep.subr.bf16.mxu0 0
        %902 = vmatpush1.bf16.msra.mxu0 %v758
        %903 = vmatprep.mubr.bf16.mxu0 %v351
        %904 = vmatmul.mubr.bf16.gmra.mrb[0].mxu0 %v350
        %v905 = vpop.f32.mrb[0].mxu0
        %v906 = vadd.f32 %v486, %v905
        %v907 = vpop.f32.mrb[0].mxu0
        %v908 = vpop.f32.mrb[0].mxu0
        %v909 = vpop.f32.mrb[0].mxu0
        %910 = vdwg.mxu0
        %911 = vmatprep.subr.bf16.mxu0 0
        %912 = vmatpush1.bf16.msra.mxu0 %v759
        %913 = vmatprep.subr.bf16.mxu0 0
        %914 = vmatpush1.bf16.msra.mxu0 %v760
        %915 = vmatprep.subr.bf16.mxu0 0
        %916 = vmatpush1.bf16.msra.mxu0 %v761
        %917 = vmatprep.subr.bf16.mxu0 0
        %918 = vmatpush1.bf16.msra.mxu0 %v762
        %919 = vmatprep.subr.bf16.mxu0 0
        %920 = vmatpush1.bf16.msra.mxu0 %v763
        %921 = vmatprep.subr.bf16.mxu0 0
        %922 = vmatpush1.bf16.msra.mxu0 %v764
        %923 = vmatprep.subr.bf16.mxu0 0
        %924 = vmatpush1.bf16.msra.mxu0 %v765
        %925 = vmatprep.subr.bf16.mxu0 0
        %926 = vmatpush1.bf16.msra.mxu0 %v766
        %927 = vmatprep.subr.bf16.mxu0 0
        %928 = vmatpush1.bf16.msra.mxu0 %v767
        %929 = vmatprep.subr.bf16.mxu0 0
        %930 = vmatpush1.bf16.msra.mxu0 %v768
        %931 = vmatprep.subr.bf16.mxu0 0
        %932 = vmatpush1.bf16.msra.mxu0 %v769
        %933 = vmatprep.subr.bf16.mxu0 0
        %934 = vmatpush1.bf16.msra.mxu0 %v770
        %935 = vmatprep.subr.bf16.mxu0 0
        %936 = vmatpush1.bf16.msra.mxu0 %v771
        %937 = vmatprep.subr.bf16.mxu0 0
        %938 = vmatpush1.bf16.msra.mxu0 %v772
        %939 = vmatprep.subr.bf16.mxu0 0
        %940 = vmatpush1.bf16.msra.mxu0 %v773
        %941 = vmatprep.subr.bf16.mxu0 0
        %942 = vmatpush1.bf16.msra.mxu0 %v774
        %943 = vmatprep.mubr.bf16.mxu0 %v353
        %944 = vmatmul.mubr.bf16.gmra.mrb[0].mxu0 %v352
        %v945 = vpop.f32.mrb[0].mxu0
        %v946 = vadd.f32 %v906, %v945
        %v947 = vpop.f32.mrb[0].mxu0
        %v948 = vpop.f32.mrb[0].mxu0
        %v949 = vpop.f32.mrb[0].mxu0
        %950 = vdwg.mxu0
        %951 = vmatprep.subr.bf16.mxu0 0
        %952 = vmatpush1.bf16.msra.mxu0 %v775
        %953 = vmatprep.subr.bf16.mxu0 0
        %954 = vmatpush1.bf16.msra.mxu0 %v776
        %955 = vmatprep.subr.bf16.mxu0 0
        %956 = vmatpush1.bf16.msra.mxu0 %v777
        %957 = vmatprep.subr.bf16.mxu0 0
        %958 = vmatpush1.bf16.msra.mxu0 %v778
        %959 = vmatprep.subr.bf16.mxu0 0
        %960 = vmatpush1.bf16.msra.mxu0 %v779
        %961 = vmatprep.subr.bf16.mxu0 0
        %962 = vmatpush1.bf16.msra.mxu0 %v780
        %963 = vmatprep.subr.bf16.mxu0 0
        %964 = vmatpush1.bf16.msra.mxu0 %v781
        %965 = vmatprep.subr.bf16.mxu0 0
        %966 = vmatpush1.bf16.msra.mxu0 %v782
        %967 = vmatprep.subr.bf16.mxu0 0
        %968 = vmatpush1.bf16.msra.mxu0 %v783
        %969 = vmatprep.subr.bf16.mxu0 0
        %970 = vmatpush1.bf16.msra.mxu0 %v784
        %971 = vmatprep.subr.bf16.mxu0 0
        %972 = vmatpush1.bf16.msra.mxu0 %v785
        %973 = vmatprep.subr.bf16.mxu0 0
        %974 = vmatpush1.bf16.msra.mxu0 %v786
        %975 = vmatprep.subr.bf16.mxu0 0
        %976 = vmatpush1.bf16.msra.mxu0 %v787
        %977 = vmatprep.subr.bf16.mxu0 0
        %978 = vmatpush1.bf16.msra.mxu0 %v788
        %979 = vmatprep.subr.bf16.mxu0 0
        %980 = vmatpush1.bf16.msra.mxu0 %v789
        %981 = vmatprep.subr.bf16.mxu0 0
        %982 = vmatpush1.bf16.msra.mxu0 %v790
        %983 = vmatprep.mubr.bf16.mxu0 %v355
        %984 = vmatmul.mubr.bf16.gmra.mrb[0].mxu0 %v354
        %v985 = vpop.f32.mrb[0].mxu0
        %v986 = vadd.f32 %v946, %v985
        %v987 = vpop.f32.mrb[0].mxu0
        %v988 = vpop.f32.mrb[0].mxu0
        %v989 = vpop.f32.mrb[0].mxu0
        %990 = vdwg.mxu0
        %991 = vmatprep.subr.bf16.mxu0 0
        %992 = vmatpush1.bf16.msra.mxu0 %v791
        %993 = vmatprep.subr.bf16.mxu0 0
        %994 = vmatpush1.bf16.msra.mxu0 %v792
        %995 = vmatprep.subr.bf16.mxu0 0
        %996 = vmatpush1.bf16.msra.mxu0 %v793
        %997 = vmatprep.subr.bf16.mxu0 0
        %998 = vmatpush1.bf16.msra.mxu0 %v794
        %999 = vmatprep.subr.bf16.mxu0 0
        %1000 = vmatpush1.bf16.msra.mxu0 %v795
        %1001 = vmatprep.subr.bf16.mxu0 0
        %1002 = vmatpush1.bf16.msra.mxu0 %v796
        %1003 = vmatprep.subr.bf16.mxu0 0
        %1004 = vmatpush1.bf16.msra.mxu0 %v797
        %1005 = vmatprep.subr.bf16.mxu0 0
        %1006 = vmatpush1.bf16.msra.mxu0 %v798
        %1007 = vmatprep.subr.bf16.mxu0 0
        %1008 = vmatpush1.bf16.msra.mxu0 %v799
        %1009 = vmatprep.subr.bf16.mxu0 0
        %1010 = vmatpush1.bf16.msra.mxu0 %v800
        %1011 = vmatprep.subr.bf16.mxu0 0
        %1012 = vmatpush1.bf16.msra.mxu0 %v801
        %1013 = vmatprep.subr.bf16.mxu0 0
        %1014 = vmatpush1.bf16.msra.mxu0 %v802
        %1015 = vmatprep.subr.bf16.mxu0 0
        %1016 = vmatpush1.bf16.msra.mxu0 %v803
        %1017 = vmatprep.subr.bf16.mxu0 0
        %1018 = vmatpush1.bf16.msra.mxu0 %v804
        %1019 = vmatprep.subr.bf16.mxu0 0
        %1020 = vmatpush1.bf16.msra.mxu0 %v805
        %1021 = vmatprep.subr.bf16.mxu0 0
        %1022 = vmatpush1.bf16.msra.mxu0 %v806
        %1023 = vmatprep.mubr.bf16.mxu0 %v357
        %1024 = vmatmul.mubr.bf16.gmra.mrb[0].mxu0 %v356
        %v1025 = vpop.f32.mrb[0].mxu0
        %v1026 = vadd.f32 %v986, %v1025
        %v1027 = vpop.f32.mrb[0].mxu0
        %v1028 = vpop.f32.mrb[0].mxu0
        %v1029 = vpop.f32.mrb[0].mxu0
        %1030 = vdwg.mxu0
        %v1031 = vld [vmem:[%s3] sm:$0x1]
        %v1032 = vstv %s303
        %v1033 = vmul.f32 %v1032, %v1031
        %v1035 = vlaneseq
        %v1036 = vshrl.u32 %v1035, 7
        %v1037 = vsub.s32 0, %v1036
        %v1038 = vrot.slane %v1033, %v1037
        %v1040 = vadd.f32 %v1026, %v1038
        %v1041 = vtanh.pop %v1040
        %v1042 = vpack.c.bf16 %v1041, %v1041
        %v1043 = vld [vmem:[#allocation9] sm:$0xff]
        %v1044 = vld [vmem:[#allocation9 + $0x8] sm:$0xff]
        %v1045 = vld [vmem:[#allocation9 + $0x10] sm:$0xff]
        %v1046 = vld [vmem:[#allocation9 + $0x18] sm:$0xff]
        %v1047 = vld [vmem:[#allocation9 + $0x20] sm:$0xff]
        %v1048 = vld [vmem:[#allocation9 + $0x28] sm:$0xff]
        %v1049 = vld [vmem:[#allocation9 + $0x30] sm:$0xff]
        %v1050 = vld [vmem:[#allocation9 + $0x38] sm:$0xff]
        %v1051 = vld [vmem:[#allocation9 + $0x40] sm:$0xff]
        %v1052 = vld [vmem:[#allocation9 + $0x48] sm:$0xff]
        %v1053 = vld [vmem:[#allocation9 + $0x50] sm:$0xff]
        %v1054 = vld [vmem:[#allocation9 + $0x58] sm:$0xff]
        %v1055 = vld [vmem:[#allocation9 + $0x60] sm:$0xff]
        %v1056 = vld [vmem:[#allocation9 + $0x68] sm:$0xff]
        %v1057 = vld [vmem:[#allocation9 + $0x70] sm:$0xff]
        %v1058 = vld [vmem:[#allocation9 + $0x78] sm:$0xff]
        %v1059 = vld [vmem:[#allocation9 + $0x80] sm:$0xff]
        %v1060 = vld [vmem:[#allocation9 + $0x88] sm:$0xff]
        %v1061 = vld [vmem:[#allocation9 + $0x90] sm:$0xff]
        %v1062 = vld [vmem:[#allocation9 + $0x98] sm:$0xff]
        %v1063 = vld [vmem:[#allocation9 + $0xa0] sm:$0xff]
        %v1064 = vld [vmem:[#allocation9 + $0xa8] sm:$0xff]
        %v1065 = vld [vmem:[#allocation9 + $0xb0] sm:$0xff]
        %v1066 = vld [vmem:[#allocation9 + $0xb8] sm:$0xff]
        %v1067 = vld [vmem:[#allocation9 + $0xc0] sm:$0xff]
        %v1068 = vld [vmem:[#allocation9 + $0xc8] sm:$0xff]
        %v1069 = vld [vmem:[#allocation9 + $0xd0] sm:$0xff]
        %v1070 = vld [vmem:[#allocation9 + $0xd8] sm:$0xff]
        %v1071 = vld [vmem:[#allocation9 + $0xe0] sm:$0xff]
        %v1072 = vld [vmem:[#allocation9 + $0xe8] sm:$0xff]
        %v1073 = vld [vmem:[#allocation9 + $0xf0] sm:$0xff]
        %v1074 = vld [vmem:[#allocation9 + $0xf8] sm:$0xff]
        %v1075 = vld [vmem:[#allocation9 + $0x100] sm:$0xff]
        %v1076 = vld [vmem:[#allocation9 + $0x108] sm:$0xff]
        %v1077 = vld [vmem:[#allocation9 + $0x110] sm:$0xff]
        %v1078 = vld [vmem:[#allocation9 + $0x118] sm:$0xff]
        %v1079 = vld [vmem:[#allocation9 + $0x120] sm:$0xff]
        %v1080 = vld [vmem:[#allocation9 + $0x128] sm:$0xff]
        %v1081 = vld [vmem:[#allocation9 + $0x130] sm:$0xff]
        %v1082 = vld [vmem:[#allocation9 + $0x138] sm:$0xff]
        %v1083 = vld [vmem:[#allocation9 + $0x140] sm:$0xff]
        %v1084 = vld [vmem:[#allocation9 + $0x148] sm:$0xff]
        %v1085 = vld [vmem:[#allocation9 + $0x150] sm:$0xff]
        %v1086 = vld [vmem:[#allocation9 + $0x158] sm:$0xff]
        %v1087 = vld [vmem:[#allocation9 + $0x160] sm:$0xff]
        %v1088 = vld [vmem:[#allocation9 + $0x168] sm:$0xff]
        %v1089 = vld [vmem:[#allocation9 + $0x170] sm:$0xff]
        %v1090 = vld [vmem:[#allocation9 + $0x178] sm:$0xff]
        %v1091 = vld [vmem:[#allocation9 + $0x180] sm:$0xff]
        %v1092 = vld [vmem:[#allocation9 + $0x188] sm:$0xff]
        %v1093 = vld [vmem:[#allocation9 + $0x190] sm:$0xff]
        %v1094 = vld [vmem:[#allocation9 + $0x198] sm:$0xff]
        %v1095 = vld [vmem:[#allocation9 + $0x1a0] sm:$0xff]
        %v1096 = vld [vmem:[#allocation9 + $0x1a8] sm:$0xff]
        %v1097 = vld [vmem:[#allocation9 + $0x1b0] sm:$0xff]
        %v1098 = vld [vmem:[#allocation9 + $0x1b8] sm:$0xff]
        %v1099 = vld [vmem:[#allocation9 + $0x1c0] sm:$0xff]
        %v1100 = vld [vmem:[#allocation9 + $0x1c8] sm:$0xff]
        %v1101 = vld [vmem:[#allocation9 + $0x1d0] sm:$0xff]
        %v1102 = vld [vmem:[#allocation9 + $0x1d8] sm:$0xff]
        %v1103 = vld [vmem:[#allocation9 + $0x1e0] sm:$0xff]
        %v1104 = vld [vmem:[#allocation9 + $0x1e8] sm:$0xff]
        %v1105 = vld [vmem:[#allocation9 + $0x1f0] sm:$0xff]
        %v1106 = vld [vmem:[#allocation9 + $0x1f8] sm:$0xff]
        %v1107 = vld [vmem:[%s6] sm:$0xff]
        %v1109 = vlaneseq
        %v1110 = vshrl.u32 %v1109, 7
        %v1111 = vsub.s32 0, %v1110
        %v1112 = vrot.slane %v1107, %v1111
        %v1113 = vlaneseq
        %v1114 = vshrl.u32 %v1113, 7
        %v1115 = vsub.s32 1, %v1114
        %v1116 = vrot.slane %v1107, %v1115
        %v1117 = vlaneseq
        %v1118 = vshrl.u32 %v1117, 7
        %v1119 = vsub.s32 2, %v1118
        %v1120 = vrot.slane %v1107, %v1119
        %v1121 = vlaneseq
        %v1122 = vshrl.u32 %v1121, 7
        %v1123 = vsub.s32 3, %v1122
        %v1124 = vrot.slane %v1107, %v1123
        %v1125 = vlaneseq
        %v1126 = vshrl.u32 %v1125, 7
        %v1127 = vsub.s32 4, %v1126
        %v1128 = vrot.slane %v1107, %v1127
        %v1129 = vlaneseq
        %v1130 = vshrl.u32 %v1129, 7
        %v1131 = vsub.s32 5, %v1130
        %v1132 = vrot.slane %v1107, %v1131
        %v1133 = vlaneseq
        %v1134 = vshrl.u32 %v1133, 7
        %v1135 = vsub.s32 6, %v1134
        %v1136 = vrot.slane %v1107, %v1135
        %v1137 = vlaneseq
        %v1138 = vshrl.u32 %v1137, 7
        %v1139 = vsub.s32 7, %v1138
        %v1140 = vrot.slane %v1107, %v1139
        %v1213 = vunpack.c.l.b16 %v1043
        %v1214 = vunpack.c.h.b16 %v1043
        %v1215 = vunpack.c.l.b16 %v1044
        %v1216 = vunpack.c.h.b16 %v1044
        %v1217 = vunpack.c.l.b16 %v1045
        %v1218 = vunpack.c.h.b16 %v1045
        %v1219 = vunpack.c.l.b16 %v1046
        %v1220 = vunpack.c.h.b16 %v1046
        %v1221 = vunpack.c.l.b16 %v1047
        %v1222 = vunpack.c.h.b16 %v1047
        %v1223 = vunpack.c.l.b16 %v1048
        %v1224 = vunpack.c.h.b16 %v1048
        %v1225 = vunpack.c.l.b16 %v1049
        %v1226 = vunpack.c.h.b16 %v1049
        %v1227 = vunpack.c.l.b16 %v1050
        %v1228 = vunpack.c.h.b16 %v1050
        %v1229 = vunpack.c.l.b16 %v1051
        %v1230 = vunpack.c.h.b16 %v1051
        %v1231 = vunpack.c.l.b16 %v1052
        %v1232 = vunpack.c.h.b16 %v1052
        %v1233 = vunpack.c.l.b16 %v1053
        %v1234 = vunpack.c.h.b16 %v1053
        %v1235 = vunpack.c.l.b16 %v1054
        %v1236 = vunpack.c.h.b16 %v1054
        %v1237 = vunpack.c.l.b16 %v1055
        %v1238 = vunpack.c.h.b16 %v1055
        %v1239 = vunpack.c.l.b16 %v1056
        %v1240 = vunpack.c.h.b16 %v1056
        %v1241 = vunpack.c.l.b16 %v1057
        %v1242 = vunpack.c.h.b16 %v1057
        %v1243 = vunpack.c.l.b16 %v1058
        %v1244 = vunpack.c.h.b16 %v1058
        %v1245 = vunpack.c.l.b16 %v1059
        %v1246 = vunpack.c.h.b16 %v1059
        %v1247 = vunpack.c.l.b16 %v1060
        %v1248 = vunpack.c.h.b16 %v1060
        %v1249 = vunpack.c.l.b16 %v1061
        %v1250 = vunpack.c.h.b16 %v1061
        %v1251 = vunpack.c.l.b16 %v1062
        %v1252 = vunpack.c.h.b16 %v1062
        %v1253 = vunpack.c.l.b16 %v1063
        %v1254 = vunpack.c.h.b16 %v1063
        %v1255 = vunpack.c.l.b16 %v1064
        %v1256 = vunpack.c.h.b16 %v1064
        %v1257 = vunpack.c.l.b16 %v1065
        %v1258 = vunpack.c.h.b16 %v1065
        %v1259 = vunpack.c.l.b16 %v1066
        %v1260 = vunpack.c.h.b16 %v1066
        %v1261 = vunpack.c.l.b16 %v1067
        %v1262 = vunpack.c.h.b16 %v1067
        %v1263 = vunpack.c.l.b16 %v1068
        %v1264 = vunpack.c.h.b16 %v1068
        %v1265 = vunpack.c.l.b16 %v1069
        %v1266 = vunpack.c.h.b16 %v1069
        %v1267 = vunpack.c.l.b16 %v1070
        %v1268 = vunpack.c.h.b16 %v1070
        %v1269 = vunpack.c.l.b16 %v1071
        %v1270 = vunpack.c.h.b16 %v1071
        %v1271 = vunpack.c.l.b16 %v1072
        %v1272 = vunpack.c.h.b16 %v1072
        %v1273 = vunpack.c.l.b16 %v1073
        %v1274 = vunpack.c.h.b16 %v1073
        %v1275 = vunpack.c.l.b16 %v1074
        %v1276 = vunpack.c.h.b16 %v1074
        %v1277 = vunpack.c.l.b16 %v1075
        %v1278 = vunpack.c.h.b16 %v1075
        %v1279 = vunpack.c.l.b16 %v1076
        %v1280 = vunpack.c.h.b16 %v1076
        %v1281 = vunpack.c.l.b16 %v1077
        %v1282 = vunpack.c.h.b16 %v1077
        %v1283 = vunpack.c.l.b16 %v1078
        %v1284 = vunpack.c.h.b16 %v1078
        %v1285 = vunpack.c.l.b16 %v1079
        %v1286 = vunpack.c.h.b16 %v1079
        %v1287 = vunpack.c.l.b16 %v1080
        %v1288 = vunpack.c.h.b16 %v1080
        %v1289 = vunpack.c.l.b16 %v1081
        %v1290 = vunpack.c.h.b16 %v1081
        %v1291 = vunpack.c.l.b16 %v1082
        %v1292 = vunpack.c.h.b16 %v1082
        %v1293 = vunpack.c.l.b16 %v1083
        %v1294 = vunpack.c.h.b16 %v1083
        %v1295 = vunpack.c.l.b16 %v1084
        %v1296 = vunpack.c.h.b16 %v1084
        %v1297 = vunpack.c.l.b16 %v1085
        %v1298 = vunpack.c.h.b16 %v1085
        %v1299 = vunpack.c.l.b16 %v1086
        %v1300 = vunpack.c.h.b16 %v1086
        %v1301 = vunpack.c.l.b16 %v1087
        %v1302 = vunpack.c.h.b16 %v1087
        %v1303 = vunpack.c.l.b16 %v1088
        %v1304 = vunpack.c.h.b16 %v1088
        %v1305 = vunpack.c.l.b16 %v1089
        %v1306 = vunpack.c.h.b16 %v1089
        %v1307 = vunpack.c.l.b16 %v1090
        %v1308 = vunpack.c.h.b16 %v1090
        %v1309 = vunpack.c.l.b16 %v1091
        %v1310 = vunpack.c.h.b16 %v1091
        %v1311 = vunpack.c.l.b16 %v1092
        %v1312 = vunpack.c.h.b16 %v1092
        %v1313 = vunpack.c.l.b16 %v1093
        %v1314 = vunpack.c.h.b16 %v1093
        %v1315 = vunpack.c.l.b16 %v1094
        %v1316 = vunpack.c.h.b16 %v1094
        %v1317 = vunpack.c.l.b16 %v1095
        %v1318 = vunpack.c.h.b16 %v1095
        %v1319 = vunpack.c.l.b16 %v1096
        %v1320 = vunpack.c.h.b16 %v1096
        %v1321 = vunpack.c.l.b16 %v1097
        %v1322 = vunpack.c.h.b16 %v1097
        %v1323 = vunpack.c.l.b16 %v1098
        %v1324 = vunpack.c.h.b16 %v1098
        %v1325 = vunpack.c.l.b16 %v1099
        %v1326 = vunpack.c.h.b16 %v1099
        %v1327 = vunpack.c.l.b16 %v1100
        %v1328 = vunpack.c.h.b16 %v1100
        %v1329 = vunpack.c.l.b16 %v1101
        %v1330 = vunpack.c.h.b16 %v1101
        %v1331 = vunpack.c.l.b16 %v1102
        %v1332 = vunpack.c.h.b16 %v1102
        %v1333 = vunpack.c.l.b16 %v1103
        %v1334 = vunpack.c.h.b16 %v1103
        %v1335 = vunpack.c.l.b16 %v1104
        %v1336 = vunpack.c.h.b16 %v1104
        %v1337 = vunpack.c.l.b16 %v1105
        %v1338 = vunpack.c.h.b16 %v1105
        %v1339 = vunpack.c.l.b16 %v1106
        %v1340 = vunpack.c.h.b16 %v1106
        %v1341 = vpack.c.b16 %v1221, %v1213
        %v1342 = vpack.c.b16 %v1222, %v1214
        %v1343 = vpack.c.b16 %v1223, %v1215
        %v1344 = vpack.c.b16 %v1224, %v1216
        %v1345 = vpack.c.b16 %v1225, %v1217
        %v1346 = vpack.c.b16 %v1226, %v1218
        %v1347 = vpack.c.b16 %v1227, %v1219
        %v1348 = vpack.c.b16 %v1228, %v1220
        %v1349 = vpack.c.b16 %v1237, %v1229
        %v1350 = vpack.c.b16 %v1238, %v1230
        %v1351 = vpack.c.b16 %v1239, %v1231
        %v1352 = vpack.c.b16 %v1240, %v1232
        %v1353 = vpack.c.b16 %v1241, %v1233
        %v1354 = vpack.c.b16 %v1242, %v1234
        %v1355 = vpack.c.b16 %v1243, %v1235
        %v1356 = vpack.c.b16 %v1244, %v1236
        %v1357 = vpack.c.b16 %v1253, %v1245
        %v1358 = vpack.c.b16 %v1254, %v1246
        %v1359 = vpack.c.b16 %v1255, %v1247
        %v1360 = vpack.c.b16 %v1256, %v1248
        %v1361 = vpack.c.b16 %v1257, %v1249
        %v1362 = vpack.c.b16 %v1258, %v1250
        %v1363 = vpack.c.b16 %v1259, %v1251
        %v1364 = vpack.c.b16 %v1260, %v1252
        %v1365 = vpack.c.b16 %v1269, %v1261
        %v1366 = vpack.c.b16 %v1270, %v1262
        %v1367 = vpack.c.b16 %v1271, %v1263
        %v1368 = vpack.c.b16 %v1272, %v1264
        %v1369 = vpack.c.b16 %v1273, %v1265
        %v1370 = vpack.c.b16 %v1274, %v1266
        %v1371 = vpack.c.b16 %v1275, %v1267
        %v1372 = vpack.c.b16 %v1276, %v1268
        %v1373 = vpack.c.b16 %v1285, %v1277
        %v1374 = vpack.c.b16 %v1286, %v1278
        %v1375 = vpack.c.b16 %v1287, %v1279
        %v1376 = vpack.c.b16 %v1288, %v1280
        %v1377 = vpack.c.b16 %v1289, %v1281
        %v1378 = vpack.c.b16 %v1290, %v1282
        %v1379 = vpack.c.b16 %v1291, %v1283
        %v1380 = vpack.c.b16 %v1292, %v1284
        %v1381 = vpack.c.b16 %v1301, %v1293
        %v1382 = vpack.c.b16 %v1302, %v1294
        %v1383 = vpack.c.b16 %v1303, %v1295
        %v1384 = vpack.c.b16 %v1304, %v1296
        %v1385 = vpack.c.b16 %v1305, %v1297
        %v1386 = vpack.c.b16 %v1306, %v1298
        %v1387 = vpack.c.b16 %v1307, %v1299
        %v1388 = vpack.c.b16 %v1308, %v1300
        %v1389 = vpack.c.b16 %v1317, %v1309
        %v1390 = vpack.c.b16 %v1318, %v1310
        %v1391 = vpack.c.b16 %v1319, %v1311
        %v1392 = vpack.c.b16 %v1320, %v1312
        %v1393 = vpack.c.b16 %v1321, %v1313
        %v1394 = vpack.c.b16 %v1322, %v1314
        %v1395 = vpack.c.b16 %v1323, %v1315
        %v1396 = vpack.c.b16 %v1324, %v1316
        %v1397 = vpack.c.b16 %v1333, %v1325
        %v1398 = vpack.c.b16 %v1334, %v1326
        %v1399 = vpack.c.b16 %v1335, %v1327
        %v1400 = vpack.c.b16 %v1336, %v1328
        %v1401 = vpack.c.b16 %v1337, %v1329
        %v1402 = vpack.c.b16 %v1338, %v1330
        %v1403 = vpack.c.b16 %v1339, %v1331
        %v1404 = vpack.c.b16 %v1340, %v1332
        %1469 = vmatprep.subr.bf16.mxu0 %v1342
        %1470 = vmatpush1.bf16.msra.mxu0 %v1341
        %1471 = vmatprep.subr.bf16.mxu0 %v1350
        %1472 = vmatpush1.bf16.msra.mxu0 %v1349
        %1473 = vmatprep.subr.bf16.mxu0 %v1358
        %1474 = vmatpush1.bf16.msra.mxu0 %v1357
        %1475 = vmatprep.subr.bf16.mxu0 %v1366
        %1476 = vmatpush1.bf16.msra.mxu0 %v1365
        %1477 = vmatprep.subr.bf16.mxu0 %v1374
        %1478 = vmatpush1.bf16.msra.mxu0 %v1373
        %1479 = vmatprep.subr.bf16.mxu0 %v1382
        %1480 = vmatpush1.bf16.msra.mxu0 %v1381
        %1481 = vmatprep.subr.bf16.mxu0 %v1390
        %1482 = vmatpush1.bf16.msra.mxu0 %v1389
        %1483 = vmatprep.subr.bf16.mxu0 %v1398
        %1484 = vmatpush1.bf16.msra.mxu0 %v1397
        %1485 = vmatprep.subr.bf16.mxu0 0
        %1486 = vmatpush1.bf16.msra.mxu0 0
        %1487 = vmatprep.subr.bf16.mxu0 0
        %1488 = vmatpush1.bf16.msra.mxu0 0
        %1489 = vmatprep.subr.bf16.mxu0 0
        %1490 = vmatpush1.bf16.msra.mxu0 0
        %1491 = vmatprep.subr.bf16.mxu0 0
        %1492 = vmatpush1.bf16.msra.mxu0 0
        %1493 = vmatprep.subr.bf16.mxu0 0
        %1494 = vmatpush1.bf16.msra.mxu0 0
        %1495 = vmatprep.subr.bf16.mxu0 0
        %1496 = vmatpush1.bf16.msra.mxu0 0
        %1497 = vmatprep.subr.bf16.mxu0 0
        %1498 = vmatpush1.bf16.msra.mxu0 0
        %1499 = vmatprep.subr.bf16.mxu0 0
        %1500 = vmatpush1.bf16.msra.mxu0 0
        %1501 = vmatprep.mubr.bf16.mxu0 0
        %1502 = vmatmul.mubr.bf16.gmra.mrb[0].mxu0 %v1042
        %v1503 = vpop.f32.mrb[0].mxu0
        %v1504 = vadd.f32 %v1112, %v1503
        %v1505 = vpop.f32.mrb[0].mxu0
        %v1506 = vadd.f32 %v1116, %v1505
        %v1507 = vpop.f32.mrb[0].mxu0
        %v1508 = vpop.f32.mrb[0].mxu0
        %1509 = vdwg.mxu0
        %1510 = vmatprep.subr.bf16.mxu0 %v1344
        %1511 = vmatpush1.bf16.msra.mxu0 %v1343
        %1512 = vmatprep.subr.bf16.mxu0 %v1352
        %1513 = vmatpush1.bf16.msra.mxu0 %v1351
        %1514 = vmatprep.subr.bf16.mxu0 %v1360
        %1515 = vmatpush1.bf16.msra.mxu0 %v1359
        %1516 = vmatprep.subr.bf16.mxu0 %v1368
        %1517 = vmatpush1.bf16.msra.mxu0 %v1367
        %1518 = vmatprep.subr.bf16.mxu0 %v1376
        %1519 = vmatpush1.bf16.msra.mxu0 %v1375
        %1520 = vmatprep.subr.bf16.mxu0 %v1384
        %1521 = vmatpush1.bf16.msra.mxu0 %v1383
        %1522 = vmatprep.subr.bf16.mxu0 %v1392
        %1523 = vmatpush1.bf16.msra.mxu0 %v1391
        %1524 = vmatprep.subr.bf16.mxu0 %v1400
        %1525 = vmatpush1.bf16.msra.mxu0 %v1399
        %1526 = vmatprep.subr.bf16.mxu0 0
        %1527 = vmatpush1.bf16.msra.mxu0 0
        %1528 = vmatprep.subr.bf16.mxu0 0
        %1529 = vmatpush1.bf16.msra.mxu0 0
        %1530 = vmatprep.subr.bf16.mxu0 0
        %1531 = vmatpush1.bf16.msra.mxu0 0
        %1532 = vmatprep.subr.bf16.mxu0 0
        %1533 = vmatpush1.bf16.msra.mxu0 0
        %1534 = vmatprep.subr.bf16.mxu0 0
        %1535 = vmatpush1.bf16.msra.mxu0 0
        %1536 = vmatprep.subr.bf16.mxu0 0
        %1537 = vmatpush1.bf16.msra.mxu0 0
        %1538 = vmatprep.subr.bf16.mxu0 0
        %1539 = vmatpush1.bf16.msra.mxu0 0
        %1540 = vmatprep.subr.bf16.mxu0 0
        %1541 = vmatpush1.bf16.msra.mxu0 0
        %1542 = vmatprep.mubr.bf16.mxu0 0
        %1543 = vmatmul.mubr.bf16.gmra.mrb[0].mxu0 %v1042
        %v1544 = vpop.f32.mrb[0].mxu0
        %v1545 = vadd.f32 %v1120, %v1544
        %v1546 = vpop.f32.mrb[0].mxu0
        %v1547 = vadd.f32 %v1124, %v1546
        %v1548 = vpop.f32.mrb[0].mxu0
        %v1549 = vpop.f32.mrb[0].mxu0
        %1550 = vdwg.mxu0
        %1551 = vmatprep.subr.bf16.mxu0 %v1346
        %1552 = vmatpush1.bf16.msra.mxu0 %v1345
        %1553 = vmatprep.subr.bf16.mxu0 %v1354
        %1554 = vmatpush1.bf16.msra.mxu0 %v1353
        %1555 = vmatprep.subr.bf16.mxu0 %v1362
        %1556 = vmatpush1.bf16.msra.mxu0 %v1361
        %1557 = vmatprep.subr.bf16.mxu0 %v1370
        %1558 = vmatpush1.bf16.msra.mxu0 %v1369
        %1559 = vmatprep.subr.bf16.mxu0 %v1378
        %1560 = vmatpush1.bf16.msra.mxu0 %v1377
        %1561 = vmatprep.subr.bf16.mxu0 %v1386
        %1562 = vmatpush1.bf16.msra.mxu0 %v1385
        %1563 = vmatprep.subr.bf16.mxu0 %v1394
        %1564 = vmatpush1.bf16.msra.mxu0 %v1393
        %1565 = vmatprep.subr.bf16.mxu0 %v1402
        %1566 = vmatpush1.bf16.msra.mxu0 %v1401
        %1567 = vmatprep.subr.bf16.mxu0 0
        %1568 = vmatpush1.bf16.msra.mxu0 0
        %1569 = vmatprep.subr.bf16.mxu0 0
        %1570 = vmatpush1.bf16.msra.mxu0 0
        %1571 = vmatprep.subr.bf16.mxu0 0
        %1572 = vmatpush1.bf16.msra.mxu0 0
        %1573 = vmatprep.subr.bf16.mxu0 0
        %1574 = vmatpush1.bf16.msra.mxu0 0
        %1575 = vmatprep.subr.bf16.mxu0 0
        %1576 = vmatpush1.bf16.msra.mxu0 0
        %1577 = vmatprep.subr.bf16.mxu0 0
        %1578 = vmatpush1.bf16.msra.mxu0 0
        %1579 = vmatprep.subr.bf16.mxu0 0
        %1580 = vmatpush1.bf16.msra.mxu0 0
        %1581 = vmatprep.subr.bf16.mxu0 0
        %1582 = vmatpush1.bf16.msra.mxu0 0
        %1583 = vmatprep.mubr.bf16.mxu0 0
        %1584 = vmatmul.mubr.bf16.gmra.mrb[0].mxu0 %v1042
        %v1585 = vpop.f32.mrb[0].mxu0
        %v1586 = vadd.f32 %v1128, %v1585
        %v1587 = vpop.f32.mrb[0].mxu0
        %v1588 = vadd.f32 %v1132, %v1587
        %v1589 = vpop.f32.mrb[0].mxu0
        %v1590 = vpop.f32.mrb[0].mxu0
        %1591 = vdwg.mxu0
        %1592 = vmatprep.subr.bf16.mxu0 %v1348
        %1593 = vmatpush1.bf16.msra.mxu0 %v1347
        %1594 = vmatprep.subr.bf16.mxu0 %v1356
        %1595 = vmatpush1.bf16.msra.mxu0 %v1355
        %1596 = vmatprep.subr.bf16.mxu0 %v1364
        %1597 = vmatpush1.bf16.msra.mxu0 %v1363
        %1598 = vmatprep.subr.bf16.mxu0 %v1372
        %1599 = vmatpush1.bf16.msra.mxu0 %v1371
        %1600 = vmatprep.subr.bf16.mxu0 %v1380
        %1601 = vmatpush1.bf16.msra.mxu0 %v1379
        %1602 = vmatprep.subr.bf16.mxu0 %v1388
        %1603 = vmatpush1.bf16.msra.mxu0 %v1387
        %1604 = vmatprep.subr.bf16.mxu0 %v1396
        %1605 = vmatpush1.bf16.msra.mxu0 %v1395
        %1606 = vmatprep.subr.bf16.mxu0 %v1404
        %1607 = vmatpush1.bf16.msra.mxu0 %v1403
        %1608 = vmatprep.subr.bf16.mxu0 0
        %1609 = vmatpush1.bf16.msra.mxu0 0
        %1610 = vmatprep.subr.bf16.mxu0 0
        %1611 = vmatpush1.bf16.msra.mxu0 0
        %1612 = vmatprep.subr.bf16.mxu0 0
        %1613 = vmatpush1.bf16.msra.mxu0 0
        %1614 = vmatprep.subr.bf16.mxu0 0
        %1615 = vmatpush1.bf16.msra.mxu0 0
        %1616 = vmatprep.subr.bf16.mxu0 0
        %1617 = vmatpush1.bf16.msra.mxu0 0
        %1618 = vmatprep.subr.bf16.mxu0 0
        %1619 = vmatpush1.bf16.msra.mxu0 0
        %1620 = vmatprep.subr.bf16.mxu0 0
        %1621 = vmatpush1.bf16.msra.mxu0 0
        %1622 = vmatprep.subr.bf16.mxu0 0
        %1623 = vmatpush1.bf16.msra.mxu0 0
        %1624 = vmatprep.mubr.bf16.mxu0 0
        %1625 = vmatmul.mubr.bf16.gmra.mrb[0].mxu0 %v1042
        %v1626 = vpop.f32.mrb[0].mxu0
        %v1627 = vadd.f32 %v1136, %v1626
        %v1628 = vpop.f32.mrb[0].mxu0
        %v1629 = vadd.f32 %v1140, %v1628
        %v1630 = vpop.f32.mrb[0].mxu0
        %v1631 = vpop.f32.mrb[0].mxu0
        %1632 = vdwg.mxu0
        %v1641 = vcombine.low %v1504, %v1506
        %v1642 = vcombine.low %v1545, %v1547
        %v1644 = vunpack.c.l.s4 1983009808
        %v1645 = vunpack.c.0.s8 %v1644
        %v1646 = vlaneseq
        %v1647 = vshrl.u32 %v1646, 7
        %v1648 = vsub.s32 %v1645, %v1647
        %v1649 = vrot.slane %v1641, %v1648
        %v1651 = vunpack.c.l.s4 1983009808
        %v1652 = vunpack.c.0.s8 %v1651
        %v1653 = vlaneseq
        %v1654 = vshrl.u32 %v1653, 7
        %v1655 = vsub.s32 %v1652, %v1654
        %v1656 = vrot.slane %v1642, %v1655
        %v1657 = vcombine.low %v1649, %v1656
        %v1658 = vcombine.low %v1586, %v1588
        %v1659 = vcombine.low %v1627, %v1629
        %v1661 = vunpack.c.l.s4 1983009808
        %v1662 = vunpack.c.0.s8 %v1661
        %v1663 = vlaneseq
        %v1664 = vshrl.u32 %v1663, 7
        %v1665 = vsub.s32 %v1662, %v1664
        %v1666 = vrot.slane %v1658, %v1665
        %v1668 = vunpack.c.l.s4 1983009808
        %v1669 = vunpack.c.0.s8 %v1668
        %v1670 = vlaneseq
        %v1671 = vshrl.u32 %v1670, 7
        %v1672 = vsub.s32 %v1669, %v1671
        %v1673 = vrot.slane %v1659, %v1672
        %v1674 = vcombine.low %v1666, %v1673
        %1677 = vst [vmem:[%s301] sm:$0xff] %v1657
        %1678 = vst [vmem:[%s301 + $0x8] sm:$0xff] %v1674
        %s1679 = sand.u32 %s168, 1
        %s1680 = scalar_lea.sflag [#allocation6], %s1679
        %s1681 = sand.u32 %s168, 1
        %s1682 = smul.addr %s1681, 16
        %s1683 = scalar_lea.vmem [#allocation10], %s1682
        // Predicated region
        $region57: #{tpu_custom_call.1} parent=43 // pred_check
          %p1684 = pneg %p178
        $region58: #{tpu_custom_call.1} parent=43 // pred_check_branch
          %1686 = sbr.rel (%p1684) target = $region60
        $region59: #{tpu_custom_call.1} parent=43 // pred_region
          %s1688 = ssub.s32 256, 256
          %1689 = vsyncadd %s1680, %s1688
          %s1690 = smul.addr %s29, 8
          %s1691 = smul.addr %s1690, 32
          %s1692 = scalar_lea.hbm %s7, %s1691
          %s1694 = sshll.u32 %s1683, 4
          %s1695 = int_to_ptr.vmem [resolvable:$true] %s1694
          %1697 = dma.vmem_to_hbm [thread:$0]  %s1695, 256, %s1692, %s1680
        $region60: #{tpu_custom_call.1} parent=43 // pred_fallthru
          _
      $region44: #{tpu_custom_call.1} parent=5 // pred_fallthru
        _
      %p1698 = scmp.le.s32.totalorder 2, %s24
      // Predicated region
      $region61: #{tpu_custom_call.1} parent=5 // pred_check
        %p1699 = pneg %p1698
      $region62: #{tpu_custom_call.1} parent=5 // pred_check_branch
        %1701 = sbr.rel (%p1699) target = $region64
      $region63: #{tpu_custom_call.1} parent=5 // pred_region
        %s1702 = ssub.s32 %s24, 2
        // Predicated region
        $region65: #{tpu_custom_call.1} parent=63 // pred_check
          %p1703 = pneg %p184
        $region66: #{tpu_custom_call.1} parent=63 // pred_check_branch
          %1705 = sbr.rel (%p1703) target = $region68
        $region67: #{tpu_custom_call.1} parent=63 // pred_region
          %s1706 = sand.u32 %s169, 1
          %s1707 = scalar_lea.sflag [#allocation6], %s1706
          %s1708 = sand.u32 %s169, 1
          %s1709 = smul.addr %s1708, 16
          %s1710 = scalar_lea.vmem [#allocation10], %s1709
          %1711 = dma.done %s1707, 256
        $region68: #{tpu_custom_call.1} parent=63 // pred_fallthru
          _
      $region64: #{tpu_custom_call.1} parent=5 // pred_fallthru
        _
    $region6: #{tpu_custom_call.1} parent=1 // loop_footer
      %s28 = sadd.s32 1, %s24
    $region7: #{tpu_custom_call.1} parent=1 // loop_footer_branch
      %23 = sbr.rel target = $region3
    $region8: #{tpu_custom_call.1} parent=1 // loop_exit
      _
    %1712 = vsyncpa [#allocation5], 1
    %s1713 = scalar_lea.sflag [#allocation5], 1
    %1714 = vsyncpa %s1713, 1
    %1715 = vsyncpa [#allocation8], 1
    %1716 = vsyncpa [#allocation6], 1
    %s1717 = scalar_lea.sflag [#allocation6], 1
    %1718 = vsyncpa %s1717, 1

</llo_original>
